<compile_context>
chip_gen: v5e
topology: v5e:2x2
jax: 0.10.0
libtpu: 0.0.40
codegen_flags: <defaults>
</compile_context>

<pallas_src>
import functools

import jax
import jax.numpy as jnp
from jax.experimental import pallas as pl
from jax.experimental.pallas import tpu as pltpu

LATENT_DIM = 32     # config['latent_dim_rec']
N_LAYERS = 2        # config['lightGCN_n_layers']

# Set to jnp.bfloat16 to halve HBM traffic on the (memory-bound) graph/emb stream; the
# MXU still accumulates in f32.  Default f32 keeps parity with the PyTorch reference.
GRAPH_DTYPE = jnp.float32


def _round_up(x, m):
    return ((x + m - 1) // m) * m


def _largest_divisor_tile(n, cap, align):
    """Largest multiple of `align` that divides `n` and is <= cap (requires n % align == 0)."""
    t = (min(cap, n) // align) * align
    while n % t != 0:
        t -= align
    return t


# --------------------------------------------------------------------------------------
# Kernel: one LightGCN propagation layer, fused with the layer-sum accumulation.
#   new_emb = Graph @ emb
#   new_acc = acc + new_emb
# Grid = (row tiles, reduction tiles); reduction axis last; f32 VMEM accumulator.
# --------------------------------------------------------------------------------------
def _graph_prop_kernel(g_ref, e_ref, acc_in_ref, new_emb_ref, acc_out_ref, acc_scratch):
    k = pl.program_id(1)

    @pl.when(k == 0)
    def _():
        acc_scratch[...] = jnp.zeros_like(acc_scratch)

    acc_scratch[...] += jnp.dot(g_ref[...], e_ref[...],
                                preferred_element_type=jnp.float32)

    @pl.when(k == pl.num_programs(1) - 1)
    def _():
        cur = acc_scratch[...]
        new_emb_ref[...] = cur.astype(new_emb_ref.dtype)
        acc_out_ref[...] = acc_in_ref[...] + cur.astype(acc_out_ref.dtype)


def graph_propagate(graph, emb, acc, *, tm, tk):
    """Returns (Graph @ emb, acc + Graph @ emb) in one tiled, pipelined pass."""
    Np, D = emb.shape
    grid = (Np // tm, Np // tk)
    return pl.pallas_call(
        _graph_prop_kernel,
        out_shape=(jax.ShapeDtypeStruct((Np, D), emb.dtype),
                   jax.ShapeDtypeStruct((Np, D), acc.dtype)),
        grid_spec=pltpu.PrefetchScalarGridSpec(
            num_scalar_prefetch=0,
            grid=grid,
            in_specs=[
                pl.BlockSpec((tm, tk), lambda i, k: (i, k)),   # graph tile (streamed)
                pl.BlockSpec((tk, D), lambda i, k: (k, 0)),    # emb slab (reduction dim)
                pl.BlockSpec((tm, D), lambda i, k: (i, 0)),    # running layer-sum in
            ],
            out_specs=[
                pl.BlockSpec((tm, D), lambda i, k: (i, 0)),    # Graph @ emb
                pl.BlockSpec((tm, D), lambda i, k: (i, 0)),    # acc + Graph @ emb
            ],
            scratch_shapes=[pltpu.VMEM((tm, D), jnp.float32)],
        ),
        compiler_params=pltpu.CompilerParams(
            dimension_semantics=("parallel", "arbitrary")),
    )(graph, emb, acc)


# --------------------------------------------------------------------------------------
# LightGCN.computer() / forward()  (glue in plain JAX; the heavy matmul is Pallas)
# --------------------------------------------------------------------------------------
def lightgcn_computer(params, graph, n_layers=N_LAYERS, tile_m=512, tile_k=1024):
    users_emb = params['embedding_user'].astype(jnp.float32)
    items_emb = params['embedding_item'].astype(jnp.float32)
    num_users = users_emb.shape[0]

    all_emb = jnp.concatenate([users_emb, items_emb], axis=0)
    N, D = all_emb.shape

    # Zero-pad rows/cols to tile multiples (mathematically inert: padded graph rows/cols
    # are zero, padded emb rows are zero), then slice the padding off at the end.
    Np = _round_up(N, 128)
    tm = _largest_divisor_tile(Np, tile_m, 8)
    tk = _largest_divisor_tile(Np, tile_k, 128)

    g = jnp.pad(graph.astype(GRAPH_DTYPE), ((0, Np - N), (0, Np - N)))
    cur = jnp.pad(all_emb, ((0, Np - N), (0, 0))).astype(GRAPH_DTYPE)
    acc = jnp.pad(all_emb, ((0, Np - N), (0, 0)))          # f32 running layer-sum

    for _ in range(n_layers):                              # eval mode: no graph dropout
        cur, acc = graph_propagate(g, cur, acc, tm=tm, tk=tk)

    light_out = acc[:N] * (1.0 / float(n_layers + 1))      # mean over stacked layers
    return light_out[:num_users], light_out[num_users:]


@functools.partial(jax.jit, static_argnames=('n_layers', 'tile_m', 'tile_k'))
def lightgcn_forward(params, graph, users, items, n_layers=N_LAYERS,
                     tile_m=512, tile_k=1024):
    all_users, all_items = lightgcn_computer(params, graph, n_layers, tile_m, tile_k)
    users_emb = all_users[users]
    items_emb = all_items[items]
    # Per perf review: the per-pair score is tiny and would need a lane-width-1 Pallas
    # output; plain XLA fusion is strictly faster, so keep it in jnp.
    return jnp.sum(users_emb * items_emb, axis=-1)


# --------------------------------------------------------------------------------------
# Pure-jnp reference (mirrors LightGCN.computer()/forward()) for a correctness check.
# --------------------------------------------------------------------------------------
def _reference_forward(params, graph, users, items, n_layers=N_LAYERS):
    all_emb = jnp.concatenate([params['embedding_user'], params['embedding_item']], 0)
    embs = [all_emb]
    cur = all_emb
    for _ in range(n_layers):
        cur = graph @ cur
        embs.append(cur)
    light_out = jnp.mean(jnp.stack(embs, axis=1), axis=1)
    U = params['embedding_user'].shape[0]
    all_users, all_items = light_out[:U], light_out[U:]
    return jnp.sum(all_users[users] * all_items[items], axis=-1)


# --------------------------------------------------------------------------------------
if __name__ == "__main__":
    key = jax.random.PRNGKey(0)
    U, I, D = 40, 100, LATENT_DIM        # small, but big enough for a multi-tile grid
    B = 8
    ks = jax.random.split(key, 5)

    params = {
        'embedding_user': 0.1 * jax.random.normal(ks[0], (U, D), jnp.float32),
        'embedding_item': 0.1 * jax.random.normal(ks[1], (I, D), jnp.float32),
    }

    # LightGCN normalized bipartite graph (dense):  D^-1/2 [[0, R], [R^T, 0]] D^-1/2
    R = (jax.random.uniform(ks[2], (U, I)) < 0.3).astype(jnp.float32)
    N = U + I
    A = jnp.zeros((N, N), jnp.float32)
    A = A.at[:U, U:].set(R).at[U:, :U].set(R.T)
    deg = A.sum(axis=1)
    d_inv = jnp.where(deg > 0, deg ** -0.5, 0.0)
    graph = d_inv[:, None] * A * d_inv[None, :]

    users = jax.random.randint(ks[3], (B,), 0, U)
    items = jax.random.randint(ks[4], (B,), 0, I)

    # Small tile caps here just to exercise the multi-tile (parallel x reduction)
    # pipeline at toy sizes; production defaults are tile_m=512, tile_k=1024.
    gamma = lightgcn_forward(params, graph, users, items,
                             n_layers=N_LAYERS, tile_m=128, tile_k=128)
    jax.block_until_ready(gamma)

    ref = _reference_forward(params, graph, users, items, n_layers=N_LAYERS)
    assert gamma.shape == (B,)
    assert jnp.allclose(gamma, ref, atol=2e-3, rtol=2e-2), (gamma, ref)
    print("KERNEL_OK")
</pallas_src>

<mosaic_0001>
module attributes {stable_mosaic.version = 11 : i64} {
  func.func @_graph_prop_kernel(%arg0: i32, %arg1: i32, %arg2: memref<128x128xf32, #tpu.memory_space<vmem>>, %arg3: memref<128x32xf32, #tpu.memory_space<vmem>>, %arg4: memref<128x32xf32, #tpu.memory_space<vmem>>, %arg5: memref<128x32xf32, #tpu.memory_space<vmem>>, %arg6: memref<128x32xf32, #tpu.memory_space<vmem>>, %arg7: memref<128x32xf32, #tpu.memory_space<vmem>>) attributes {dimension_semantics = [#tpu.dimension_semantics<parallel>, #tpu.dimension_semantics<arbitrary>], iteration_bounds = array<i64: 2, 2>, scalar_prefetch = 0 : i64, scratch_operands = 1 : i64, tpu.core_type = #tpu.core_type<tc>, window_params = [{transform_indices = @transform_0, window_bounds = array<i64: 128, 128>}, {transform_indices = @transform_1, window_bounds = array<i64: 128, 32>}, {transform_indices = @transform_2, window_bounds = array<i64: 128, 32>}, {transform_indices = @transform_3, window_bounds = array<i64: 128, 32>}, {transform_indices = @transform_4, window_bounds = array<i64: 128, 32>}]} {
    %c0_i32 = arith.constant 0 : i32
    %0 = arith.cmpi eq, %arg1, %c0_i32 : i32
    %1 = arith.extui %0 : i1 to i32
    %c0_i32_0 = arith.constant 0 : i32
    %2 = arith.cmpi ne, %1, %c0_i32_0 : i32
    scf.if %2 {
      %cst_9 = arith.constant 0.000000e+00 : f32
      %12 = vector.broadcast %cst_9 : f32 to vector<128x32xf32>
      %c0_10 = arith.constant 0 : index
      %c0_11 = arith.constant 0 : index
      %13 = vector.load %arg7[%c0_10, %c0_11] : memref<128x32xf32, #tpu.memory_space<vmem>>, vector<128x32xf32>
      tpu.vector_store %arg7[%c0_10, %c0_11], %12 {strides = array<i32>} : memref<128x32xf32, #tpu.memory_space<vmem>>, vector<128x32xf32>,
    } else {
    }
    %c0 = arith.constant 0 : index
    %c0_1 = arith.constant 0 : index
    %3 = vector.load %arg7[%c0, %c0_1] : memref<128x32xf32, #tpu.memory_space<vmem>>, vector<128x32xf32>
    %c0_2 = arith.constant 0 : index
    %c0_3 = arith.constant 0 : index
    %4 = vector.load %arg2[%c0_2, %c0_3] : memref<128x128xf32, #tpu.memory_space<vmem>>, vector<128x128xf32>
    %c0_4 = arith.constant 0 : index
    %c0_5 = arith.constant 0 : index
    %5 = vector.load %arg3[%c0_4, %c0_5] : memref<128x32xf32, #tpu.memory_space<vmem>>, vector<128x32xf32>
    %cst = arith.constant dense<0.000000e+00> : vector<128x32xf32>
    %6 = tpu.matmul %4, %5, %cst {dimension_numbers = #tpu.dot_dimension_numbers<[1], [0], [0], [1], [0, 0, 1, 1], [], []>} : vector<128x128xf32>, vector<128x32xf32>, vector<128x32xf32> -> vector<128x32xf32>
    %7 = arith.addf %3, %6 : vector<128x32xf32>
    %c0_6 = arith.constant 0 : index
    %c0_7 = arith.constant 0 : index
    %8 = vector.load %arg7[%c0_6, %c0_7] : memref<128x32xf32, #tpu.memory_space<vmem>>, vector<128x32xf32>
    tpu.vector_store %arg7[%c0_6, %c0_7], %7 {strides = array<i32>} : memref<128x32xf32, #tpu.memory_space<vmem>>, vector<128x32xf32>,
    %c1_i32 = arith.constant 1 : i32
    %9 = arith.cmpi eq, %arg1, %c1_i32 : i32
    %10 = arith.extui %9 : i1 to i32
    %c0_i32_8 = arith.constant 0 : i32
    %11 = arith.cmpi ne, %10, %c0_i32_8 : i32
    scf.if %11 {
      %c0_9 = arith.constant 0 : index
      %c0_10 = arith.constant 0 : index
      %12 = vector.load %arg7[%c0_9, %c0_10] : memref<128x32xf32, #tpu.memory_space<vmem>>, vector<128x32xf32>
      %c0_11 = arith.constant 0 : index
      %c0_12 = arith.constant 0 : index
      %13 = vector.load %arg5[%c0_11, %c0_12] : memref<128x32xf32, #tpu.memory_space<vmem>>, vector<128x32xf32>
      tpu.vector_store %arg5[%c0_11, %c0_12], %12 {strides = array<i32>} : memref<128x32xf32, #tpu.memory_space<vmem>>, vector<128x32xf32>,
      %c0_13 = arith.constant 0 : index
      %c0_14 = arith.constant 0 : index
      %14 = vector.load %arg4[%c0_13, %c0_14] : memref<128x32xf32, #tpu.memory_space<vmem>>, vector<128x32xf32>
      %15 = arith.addf %14, %12 : vector<128x32xf32>
      %c0_15 = arith.constant 0 : index
      %c0_16 = arith.constant 0 : index
      %16 = vector.load %arg6[%c0_15, %c0_16] : memref<128x32xf32, #tpu.memory_space<vmem>>, vector<128x32xf32>
      tpu.vector_store %arg6[%c0_15, %c0_16], %15 {strides = array<i32>} : memref<128x32xf32, #tpu.memory_space<vmem>>, vector<128x32xf32>,
    } else {
    }
    return
  }
  func.func @transform_0(%arg0: i32, %arg1: i32) -> (i32, i32) {
    %c0_i32 = arith.constant 0 : i32
    return %arg0, %arg1 : i32, i32
  }
  func.func @transform_1(%arg0: i32, %arg1: i32) -> (i32, i32) {
    %c0_i32 = arith.constant 0 : i32
    %c0_i32_0 = arith.constant 0 : i32
    return %arg1, %c0_i32 : i32, i32
  }
  func.func @transform_2(%arg0: i32, %arg1: i32) -> (i32, i32) {
    %c0_i32 = arith.constant 0 : i32
    %c0_i32_0 = arith.constant 0 : i32
    return %arg0, %c0_i32 : i32, i32
  }
  func.func @transform_3(%arg0: i32, %arg1: i32) -> (i32, i32) {
    %c0_i32 = arith.constant 0 : i32
    %c0_i32_0 = arith.constant 0 : i32
    return %arg0, %c0_i32 : i32, i32
  }
  func.func @transform_4(%arg0: i32, %arg1: i32) -> (i32, i32) {
    %c0_i32 = arith.constant 0 : i32
    %c0_i32_0 = arith.constant 0 : i32
    return %arg0, %c0_i32 : i32, i32
  }
}

module attributes {stable_mosaic.version = 11 : i64} {
  func.func @_graph_prop_kernel(%arg0: i32, %arg1: i32, %arg2: memref<128x128xf32, #tpu.memory_space<vmem>>, %arg3: memref<128x32xf32, #tpu.memory_space<vmem>>, %arg4: memref<128x32xf32, #tpu.memory_space<vmem>>, %arg5: memref<128x32xf32, #tpu.memory_space<vmem>>, %arg6: memref<128x32xf32, #tpu.memory_space<vmem>>, %arg7: memref<128x32xf32, #tpu.memory_space<vmem>>) attributes {dimension_semantics = [#tpu.dimension_semantics<parallel>, #tpu.dimension_semantics<arbitrary>], iteration_bounds = array<i64: 2, 2>, scalar_prefetch = 0 : i64, scratch_operands = 1 : i64, tpu.core_type = #tpu.core_type<tc>, window_params = [{transform_indices = @transform_0, window_bounds = array<i64: 128, 128>}, {transform_indices = @transform_1, window_bounds = array<i64: 128, 32>}, {transform_indices = @transform_2, window_bounds = array<i64: 128, 32>}, {transform_indices = @transform_3, window_bounds = array<i64: 128, 32>}, {transform_indices = @transform_4, window_bounds = array<i64: 128, 32>}]} {
    %c0_i32 = arith.constant 0 : i32
    %0 = arith.cmpi eq, %arg1, %c0_i32 : i32
    %1 = arith.extui %0 : i1 to i32
    %c0_i32_0 = arith.constant 0 : i32
    %2 = arith.cmpi ne, %1, %c0_i32_0 : i32
    scf.if %2 {
      %cst_9 = arith.constant 0.000000e+00 : f32
      %12 = vector.broadcast %cst_9 : f32 to vector<128x32xf32>
      %c0_10 = arith.constant 0 : index
      %c0_11 = arith.constant 0 : index
      %13 = vector.load %arg7[%c0_10, %c0_11] : memref<128x32xf32, #tpu.memory_space<vmem>>, vector<128x32xf32>
      tpu.vector_store %arg7[%c0_10, %c0_11], %12 {strides = array<i32>} : memref<128x32xf32, #tpu.memory_space<vmem>>, vector<128x32xf32>,
    } else {
    }
    %c0 = arith.constant 0 : index
    %c0_1 = arith.constant 0 : index
    %3 = vector.load %arg7[%c0, %c0_1] : memref<128x32xf32, #tpu.memory_space<vmem>>, vector<128x32xf32>
    %c0_2 = arith.constant 0 : index
    %c0_3 = arith.constant 0 : index
    %4 = vector.load %arg2[%c0_2, %c0_3] : memref<128x128xf32, #tpu.memory_space<vmem>>, vector<128x128xf32>
    %c0_4 = arith.constant 0 : index
    %c0_5 = arith.constant 0 : index
    %5 = vector.load %arg3[%c0_4, %c0_5] : memref<128x32xf32, #tpu.memory_space<vmem>>, vector<128x32xf32>
    %cst = arith.constant dense<0.000000e+00> : vector<128x32xf32>
    %6 = tpu.matmul %4, %5, %cst {dimension_numbers = #tpu.dot_dimension_numbers<[1], [0], [0], [1], [0, 0, 1, 1], [], []>} : vector<128x128xf32>, vector<128x32xf32>, vector<128x32xf32> -> vector<128x32xf32>
    %7 = arith.addf %3, %6 : vector<128x32xf32>
    %c0_6 = arith.constant 0 : index
    %c0_7 = arith.constant 0 : index
    %8 = vector.load %arg7[%c0_6, %c0_7] : memref<128x32xf32, #tpu.memory_space<vmem>>, vector<128x32xf32>
    tpu.vector_store %arg7[%c0_6, %c0_7], %7 {strides = array<i32>} : memref<128x32xf32, #tpu.memory_space<vmem>>, vector<128x32xf32>,
    %c1_i32 = arith.constant 1 : i32
    %9 = arith.cmpi eq, %arg1, %c1_i32 : i32
    %10 = arith.extui %9 : i1 to i32
    %c0_i32_8 = arith.constant 0 : i32
    %11 = arith.cmpi ne, %10, %c0_i32_8 : i32
    scf.if %11 {
      %c0_9 = arith.constant 0 : index
      %c0_10 = arith.constant 0 : index
      %12 = vector.load %arg7[%c0_9, %c0_10] : memref<128x32xf32, #tpu.memory_space<vmem>>, vector<128x32xf32>
      %c0_11 = arith.constant 0 : index
      %c0_12 = arith.constant 0 : index
      %13 = vector.load %arg5[%c0_11, %c0_12] : memref<128x32xf32, #tpu.memory_space<vmem>>, vector<128x32xf32>
      tpu.vector_store %arg5[%c0_11, %c0_12], %12 {strides = array<i32>} : memref<128x32xf32, #tpu.memory_space<vmem>>, vector<128x32xf32>,
      %c0_13 = arith.constant 0 : index
      %c0_14 = arith.constant 0 : index
      %14 = vector.load %arg4[%c0_13, %c0_14] : memref<128x32xf32, #tpu.memory_space<vmem>>, vector<128x32xf32>
      %15 = arith.addf %14, %12 : vector<128x32xf32>
      %c0_15 = arith.constant 0 : index
      %c0_16 = arith.constant 0 : index
      %16 = vector.load %arg6[%c0_15, %c0_16] : memref<128x32xf32, #tpu.memory_space<vmem>>, vector<128x32xf32>
      tpu.vector_store %arg6[%c0_15, %c0_16], %15 {strides = array<i32>} : memref<128x32xf32, #tpu.memory_space<vmem>>, vector<128x32xf32>,
    } else {
    }
    return
  }
  func.func @transform_0(%arg0: i32, %arg1: i32) -> (i32, i32) {
    %c0_i32 = arith.constant 0 : i32
    return %arg0, %arg1 : i32, i32
  }
  func.func @transform_1(%arg0: i32, %arg1: i32) -> (i32, i32) {
    %c0_i32 = arith.constant 0 : i32
    %c0_i32_0 = arith.constant 0 : i32
    return %arg1, %c0_i32 : i32, i32
  }
  func.func @transform_2(%arg0: i32, %arg1: i32) -> (i32, i32) {
    %c0_i32 = arith.constant 0 : i32
    %c0_i32_0 = arith.constant 0 : i32
    return %arg0, %c0_i32 : i32, i32
  }
  func.func @transform_3(%arg0: i32, %arg1: i32) -> (i32, i32) {
    %c0_i32 = arith.constant 0 : i32
    %c0_i32_0 = arith.constant 0 : i32
    return %arg0, %c0_i32 : i32, i32
  }
  func.func @transform_4(%arg0: i32, %arg1: i32) -> (i32, i32) {
    %c0_i32 = arith.constant 0 : i32
    %c0_i32_0 = arith.constant 0 : i32
    return %arg0, %c0_i32 : i32, i32
  }
}

</mosaic_0001>

<llo_original>
// kernel: lightgcn_forward.2
$region0: #{lightgcn_forward.2}
  #allocation0 [shape = 'u32[]', space=smem, size = 0x4, offset = 0x4, fixed_abs, tag = 'smem constant byte address 0x4 - core index']
  #allocation1 [shape = 'u32[72,128]{1,0:T(1,128)}', space=vmem, size = 0x9000, scoped, tag = 'internal scratch']
  #allocation2 [shape = 'f32[128,32]{1,0:T(8,128)}', space=vmem, size = 0x10000, scoped, tag = 'scratch operand']
  %s0 = inlined_call_operand.vmem [shape: f32[256,256], index: 0, kind: input, shape index: {}]
  %s1 = inlined_call_operand.vmem [shape: f32[256,32], index: 1, kind: input, shape index: {}, may-alias: {1,2}]
  %s2 = inlined_call_operand.vmem [shape: f32[256,32], index: 2, kind: input, shape index: {}, may-alias: {1,2}]
  %s3 = inlined_call_operand.vmem [shape: f32[256,32], index: 3, kind: output, shape index: {0}]
  %s4 = inlined_call_operand.vmem [shape: f32[256,32], index: 4, kind: output, shape index: {1}]
  %5 = xla_tuple %s3, %s4
  %s6 = sld [smem:[#allocation0]]
  $region99: #{lightgcn_forward.2} parent=0
    _
  %s8 = ssub.s32 1, %s6
  %s9 = scalar_select 0, %s8, %s6
  $region1: #{lightgcn_forward.2} parent=0
    #allocation3 [shape = 'u8[131072]{0}', space=vmem, size = 0x20000, scoped, tag = 'input window, operand 0']
    loop: start=0, step=1, limit=6
    $region2: #{lightgcn_forward.2} parent=1 // loop_pre_header
      _
    $region3: #{lightgcn_forward.2} parent=1 // loop_header
      %s11 = sphi 0, %s15
      %p12 = scmp.ge.s32.totalorder %s11, 6
      %s18 = sphi 0, %s30
      %s19 = sphi 0, %s26
      %s20 = sphi 0, %s18
      %s21 = sphi 0, %s19
      %s22 = sphi 0, %s20
      %s23 = sphi 0, %s21
      %s35 = sphi 0, %s37
      %s38 = sphi 0, %s35
      %s39 = sphi 0, %s38
      %s55 = sphi 0, %s39
      %s61 = sphi 0, %s63
      %s64 = sphi 0, %s61
      %s65 = sphi 0, %s64
      %s81 = sphi 0, %s65
      %s87 = sphi 0, %s89
      %s90 = sphi 0, %s87
      %s91 = sphi 0, %s90
      %s107 = sphi 0, %s91
      %s113 = sphi 0, %s115
      %s116 = sphi 0, %s113
      %s117 = sphi 0, %s116
      %s133 = sphi 0, %s117
      %s139 = sphi 0, %s141
      %s142 = sphi 0, %s139
      %s143 = sphi 0, %s142
      %s159 = sphi 0, %s143
    $region4: #{lightgcn_forward.2} parent=1 // loop_header_branch
      %14 = sbr.rel (%p12) target = $region8
    $region5: #{lightgcn_forward.2} parent=1 // loop_body
      %s16 = ssub.s32 %s11, 1
      %s17 = ssub.s32 %s11, 2
      %s24 = sadd.s32 1, %s19
      %p25 = scmp.ge.s32.totalorder %s24, 2
      %s26 = scalar_select %p25, 0, %s24
      %s27 = sadd.s32 1, %s18
      %s28 = scalar_select %p25, %s27, %s18
      %p29 = scmp.ge.s32.totalorder %s28, 2
      %s30 = scalar_select %p29, 0, %s28
      %s31 = ssub.s32 %s18, %s30
      %s32 = ssub.s32 %s19, %s26
      %s33 = sor.u32 %s31, %s32
      %p34 = scmp.eq.s32.totalorder %s33, 0
      %s36 = sadd.s32 %s35, 1
      %s37 = scalar_select %p34, %s35, %s36
      %p40 = pneg %p34
      %p41 = scmp.eq.s32.totalorder %s11, 3
      %p42 = por %p40, %p41
      %p43 = scmp.ne.s32.totalorder %s35, %s38
      %p44 = scmp.eq.s32.totalorder %s11, 0
      %p45 = por %p43, %p44
      %p46 = scmp.ne.s32.totalorder %s35, %s38
      %p47 = scmp.eq.s32.totalorder %s16, 3
      %p48 = por %p46, %p47
      %p49 = scmp.ne.s32.totalorder %s38, %s39
      %p50 = scmp.eq.s32.totalorder %s16, 0
      %p51 = por %p49, %p50
      %p52 = scmp.ne.s32.totalorder %s38, %s39
      %p53 = scmp.eq.s32.totalorder %s17, 3
      %p54 = por %p52, %p53
      %p56 = scmp.ne.s32.totalorder %s39, %s55
      %p57 = scmp.eq.s32.totalorder %s17, 0
      %p58 = por %p56, %p57
      %s59 = ssub.s32 %s19, %s26
      %p60 = scmp.eq.s32.totalorder %s59, 0
      %s62 = sadd.s32 %s61, 1
      %s63 = scalar_select %p60, %s61, %s62
      %p66 = pneg %p60
      %p67 = scmp.eq.s32.totalorder %s11, 3
      %p68 = por %p66, %p67
      %p69 = scmp.ne.s32.totalorder %s61, %s64
      %p70 = scmp.eq.s32.totalorder %s11, 0
      %p71 = por %p69, %p70
      %p72 = scmp.ne.s32.totalorder %s61, %s64
      %p73 = scmp.eq.s32.totalorder %s16, 3
      %p74 = por %p72, %p73
      %p75 = scmp.ne.s32.totalorder %s64, %s65
      %p76 = scmp.eq.s32.totalorder %s16, 0
      %p77 = por %p75, %p76
      %p78 = scmp.ne.s32.totalorder %s64, %s65
      %p79 = scmp.eq.s32.totalorder %s17, 3
      %p80 = por %p78, %p79
      %p82 = scmp.ne.s32.totalorder %s65, %s81
      %p83 = scmp.eq.s32.totalorder %s17, 0
      %p84 = por %p82, %p83
      %s85 = ssub.s32 %s18, %s30
      %p86 = scmp.eq.s32.totalorder %s85, 0
      %s88 = sadd.s32 %s87, 1
      %s89 = scalar_select %p86, %s87, %s88
      %p92 = pneg %p86
      %p93 = scmp.eq.s32.totalorder %s11, 3
      %p94 = por %p92, %p93
      %p95 = scmp.ne.s32.totalorder %s87, %s90
      %p96 = scmp.eq.s32.totalorder %s11, 0
      %p97 = por %p95, %p96
      %p98 = scmp.ne.s32.totalorder %s87, %s90
      %p99 = scmp.eq.s32.totalorder %s16, 3
      %p100 = por %p98, %p99
      %p101 = scmp.ne.s32.totalorder %s90, %s91
      %p102 = scmp.eq.s32.totalorder %s16, 0
      %p103 = por %p101, %p102
      %p104 = scmp.ne.s32.totalorder %s90, %s91
      %p105 = scmp.eq.s32.totalorder %s17, 3
      %p106 = por %p104, %p105
      %p108 = scmp.ne.s32.totalorder %s91, %s107
      %p109 = scmp.eq.s32.totalorder %s17, 0
      %p110 = por %p108, %p109
      %s111 = ssub.s32 %s18, %s30
      %p112 = scmp.eq.s32.totalorder %s111, 0
      %s114 = sadd.s32 %s113, 1
      %s115 = scalar_select %p112, %s113, %s114
      %p118 = pneg %p112
      %p119 = scmp.eq.s32.totalorder %s11, 3
      %p120 = por %p118, %p119
      %p121 = scmp.ne.s32.totalorder %s113, %s116
      %p122 = scmp.eq.s32.totalorder %s11, 0
      %p123 = por %p121, %p122
      %p124 = scmp.ne.s32.totalorder %s113, %s116
      %p125 = scmp.eq.s32.totalorder %s16, 3
      %p126 = por %p124, %p125
      %p127 = scmp.ne.s32.totalorder %s116, %s117
      %p128 = scmp.eq.s32.totalorder %s16, 0
      %p129 = por %p127, %p128
      %p130 = scmp.ne.s32.totalorder %s116, %s117
      %p131 = scmp.eq.s32.totalorder %s17, 3
      %p132 = por %p130, %p131
      %p134 = scmp.ne.s32.totalorder %s117, %s133
      %p135 = scmp.eq.s32.totalorder %s17, 0
      %p136 = por %p134, %p135
      %s137 = ssub.s32 %s18, %s30
      %p138 = scmp.eq.s32.totalorder %s137, 0
      %s140 = sadd.s32 %s139, 1
      %s141 = scalar_select %p138, %s139, %s140
      %p144 = pneg %p138
      %p145 = scmp.eq.s32.totalorder %s11, 3
      %p146 = por %p144, %p145
      %p147 = scmp.ne.s32.totalorder %s139, %s142
      %p148 = scmp.eq.s32.totalorder %s11, 0
      %p149 = por %p147, %p148
      %p150 = scmp.ne.s32.totalorder %s139, %s142
      %p151 = scmp.eq.s32.totalorder %s16, 3
      %p152 = por %p150, %p151
      %p153 = scmp.ne.s32.totalorder %s142, %s143
      %p154 = scmp.eq.s32.totalorder %s16, 0
      %p155 = por %p153, %p154
      %p156 = scmp.ne.s32.totalorder %s142, %s143
      %p157 = scmp.eq.s32.totalorder %s17, 3
      %p158 = por %p156, %p157
      %p160 = scmp.ne.s32.totalorder %s143, %s159
      %p161 = scmp.eq.s32.totalorder %s17, 0
      %p162 = por %p160, %p161
      %p163 = scmp.le.s32.totalorder 1, %s11
      %p164 = scmp.lt.s32.totalorder %s11, 5
      %p165 = pnand %p163, %p164
      %p166 = pneg %p165
      // Predicated region
      $region9: #{lightgcn_forward.2} parent=5 // pred_check
        _
      $region10: #{lightgcn_forward.2} parent=5 // pred_check_branch
        %168 = sbr.rel (%p165) target = $region12
      $region11: #{lightgcn_forward.2} parent=5 // pred_region
        %s169 = ssub.s32 %s11, 1
      $region12: #{lightgcn_forward.2} parent=5 // pred_fallthru
        _
      %p170 = scmp.lt.s32.totalorder %s11, 4
      // Predicated region
      $region13: #{lightgcn_forward.2} parent=5 // pred_check
        %p171 = pneg %p170
      $region14: #{lightgcn_forward.2} parent=5 // pred_check_branch
        %173 = sbr.rel (%p171) target = $region16
      $region15: #{lightgcn_forward.2} parent=5 // pred_region
        // Predicated region
        $region17: #{lightgcn_forward.2} parent=15 // pred_check
          %p174 = pneg %p45
        $region18: #{lightgcn_forward.2} parent=15 // pred_check_branch
          %176 = sbr.rel (%p174) target = $region20
        $region19: #{lightgcn_forward.2} parent=15 // pred_region
          %s177 = sand.u32 %s35, 1
          %s178 = sand.u32 %s35, 1
          %s179 = smul.addr %s178, 128
          %s180 = scalar_lea.vmem [#allocation3], %s179
          %s181 = smul.u32 16, %s18
          %s182 = smul.addr %s181, 2
          %s183 = sadd.s32 %s19, %s182
          %s184 = smul.addr %s183, 8
          %s185 = scalar_lea.vmem %s0, %s184
          // Predicated region
          $region21: #{lightgcn_forward.2} parent=19 // pred_check
            _
          $region22: #{lightgcn_forward.2} parent=19 // pred_check_branch
            %187 = sbr.rel (0) target = $region24
          $region23: #{lightgcn_forward.2} parent=19 // pred_region
            // Predicated region
            $region25: #{lightgcn_forward.2} parent=23 // pred_check
              _
            $region26: #{lightgcn_forward.2} parent=23 // pred_check_branch
              %189 = sbr.rel (0) target = $region28
            $region27: #{lightgcn_forward.2} parent=23 // pred_region
              // Predicated region
              $region40: #{lightgcn_forward.2} parent=27 // pred_check
                _
              $region41: #{lightgcn_forward.2} parent=27 // pred_check_branch
                %235 = sbr.rel (0) target = $region43
              $region42: #{lightgcn_forward.2} parent=27 // pred_region
                loop: start=0, step=1, limit=1
                $region44: #{lightgcn_forward.2} parent=42 // loop_pre_header
                  _
                $region45: #{lightgcn_forward.2} parent=42 // loop_header
                  %s237 = sphi 0, %s241
                  %p238 = scmp.ge.s32.totalorder %s237, 1
                  %s242 = sphi %s185, %s185
                  %s243 = sphi %s180, %s180
                $region46: #{lightgcn_forward.2} parent=42 // loop_header_branch
                  %240 = sbr.rel (%p238) target = $region50
                $region47: #{lightgcn_forward.2} parent=42 // loop_body
                  %v244 = vld [vmem:[%s242] sm:$0xff]
                  %245 = vst [vmem:[%s243] sm:$0xff] %v244
                  %v246 = vld [vmem:[%s242 + $0x10] sm:$0xff]
                  %247 = vst [vmem:[%s243 + $0x8] sm:$0xff] %v246
                  %v248 = vld [vmem:[%s242 + $0x20] sm:$0xff]
                  %249 = vst [vmem:[%s243 + $0x10] sm:$0xff] %v248
                  %v250 = vld [vmem:[%s242 + $0x30] sm:$0xff]
                  %251 = vst [vmem:[%s243 + $0x18] sm:$0xff] %v250
                  %v252 = vld [vmem:[%s242 + $0x40] sm:$0xff]
                  %253 = vst [vmem:[%s243 + $0x20] sm:$0xff] %v252
                  %v254 = vld [vmem:[%s242 + $0x50] sm:$0xff]
                  %255 = vst [vmem:[%s243 + $0x28] sm:$0xff] %v254
                  %v256 = vld [vmem:[%s242 + $0x60] sm:$0xff]
                  %257 = vst [vmem:[%s243 + $0x30] sm:$0xff] %v256
                  %v258 = vld [vmem:[%s242 + $0x70] sm:$0xff]
                  %259 = vst [vmem:[%s243 + $0x38] sm:$0xff] %v258
                  %v260 = vld [vmem:[%s242 + $0x80] sm:$0xff]
                  %261 = vst [vmem:[%s243 + $0x40] sm:$0xff] %v260
                  %v262 = vld [vmem:[%s242 + $0x90] sm:$0xff]
                  %263 = vst [vmem:[%s243 + $0x48] sm:$0xff] %v262
                  %v264 = vld [vmem:[%s242 + $0xa0] sm:$0xff]
                  %265 = vst [vmem:[%s243 + $0x50] sm:$0xff] %v264
                  %v266 = vld [vmem:[%s242 + $0xb0] sm:$0xff]
                  %267 = vst [vmem:[%s243 + $0x58] sm:$0xff] %v266
                  %v268 = vld [vmem:[%s242 + $0xc0] sm:$0xff]
                  %269 = vst [vmem:[%s243 + $0x60] sm:$0xff] %v268
                  %v270 = vld [vmem:[%s242 + $0xd0] sm:$0xff]
                  %271 = vst [vmem:[%s243 + $0x68] sm:$0xff] %v270
                  %v272 = vld [vmem:[%s242 + $0xe0] sm:$0xff]
                  %273 = vst [vmem:[%s243 + $0x70] sm:$0xff] %v272
                  %v274 = vld [vmem:[%s242 + $0xf0] sm:$0xff]
                  %275 = vst [vmem:[%s243 + $0x78] sm:$0xff] %v274
                $region48: #{lightgcn_forward.2} parent=42 // loop_footer
                  %s241 = sadd.s32 1, %s237
                $region49: #{lightgcn_forward.2} parent=42 // loop_footer_branch
                  %236 = sbr.rel target = $region45
                $region50: #{lightgcn_forward.2} parent=42 // loop_exit
                  _
              $region43: #{lightgcn_forward.2} parent=27 // pred_fallthru
                _
              // Predicated region
              $region51: #{lightgcn_forward.2} parent=27 // pred_check
                _
              $region52: #{lightgcn_forward.2} parent=27 // pred_check_branch
                %277 = sbr.rel target = $region54
              $region53: #{lightgcn_forward.2} parent=27 // pred_region
                _
              $region54: #{lightgcn_forward.2} parent=27 // pred_fallthru
                _
            $region28: #{lightgcn_forward.2} parent=23 // pred_fallthru
              _
            // Predicated region
            $region29: #{lightgcn_forward.2} parent=23 // pred_check
              _
            $region30: #{lightgcn_forward.2} parent=23 // pred_check_branch
              %191 = sbr.rel target = $region32
            $region31: #{lightgcn_forward.2} parent=23 // pred_region
              %s193 = ssub.s32 256, 1
              loop: start=0, step=1, limit=1
              $region33: #{lightgcn_forward.2} parent=31 // loop_pre_header
                _
              $region34: #{lightgcn_forward.2} parent=31 // loop_header
                %s195 = sphi 0, %s199
                %p196 = scmp.ge.s32.totalorder %s195, 1
                %s200 = sphi %s185, %s185
                %s201 = sphi %s180, %s180
              $region35: #{lightgcn_forward.2} parent=31 // loop_header_branch
                %198 = sbr.rel (%p196) target = $region39
              $region36: #{lightgcn_forward.2} parent=31 // loop_body
                %v202 = vld [vmem:[%s200] sm:%s193]
                %203 = vst [vmem:[%s201] sm:%s193] %v202
                %v204 = vld [vmem:[%s200 + $0x10] sm:%s193]
                %205 = vst [vmem:[%s201 + $0x8] sm:%s193] %v204
                %v206 = vld [vmem:[%s200 + $0x20] sm:%s193]
                %207 = vst [vmem:[%s201 + $0x10] sm:%s193] %v206
                %v208 = vld [vmem:[%s200 + $0x30] sm:%s193]
                %209 = vst [vmem:[%s201 + $0x18] sm:%s193] %v208
                %v210 = vld [vmem:[%s200 + $0x40] sm:%s193]
                %211 = vst [vmem:[%s201 + $0x20] sm:%s193] %v210
                %v212 = vld [vmem:[%s200 + $0x50] sm:%s193]
                %213 = vst [vmem:[%s201 + $0x28] sm:%s193] %v212
                %v214 = vld [vmem:[%s200 + $0x60] sm:%s193]
                %215 = vst [vmem:[%s201 + $0x30] sm:%s193] %v214
                %v216 = vld [vmem:[%s200 + $0x70] sm:%s193]
                %217 = vst [vmem:[%s201 + $0x38] sm:%s193] %v216
                %v218 = vld [vmem:[%s200 + $0x80] sm:%s193]
                %219 = vst [vmem:[%s201 + $0x40] sm:%s193] %v218
                %v220 = vld [vmem:[%s200 + $0x90] sm:%s193]
                %221 = vst [vmem:[%s201 + $0x48] sm:%s193] %v220
                %v222 = vld [vmem:[%s200 + $0xa0] sm:%s193]
                %223 = vst [vmem:[%s201 + $0x50] sm:%s193] %v222
                %v224 = vld [vmem:[%s200 + $0xb0] sm:%s193]
                %225 = vst [vmem:[%s201 + $0x58] sm:%s193] %v224
                %v226 = vld [vmem:[%s200 + $0xc0] sm:%s193]
                %227 = vst [vmem:[%s201 + $0x60] sm:%s193] %v226
                %v228 = vld [vmem:[%s200 + $0xd0] sm:%s193]
                %229 = vst [vmem:[%s201 + $0x68] sm:%s193] %v228
                %v230 = vld [vmem:[%s200 + $0xe0] sm:%s193]
                %231 = vst [vmem:[%s201 + $0x70] sm:%s193] %v230
                %v232 = vld [vmem:[%s200 + $0xf0] sm:%s193]
                %233 = vst [vmem:[%s201 + $0x78] sm:%s193] %v232
              $region37: #{lightgcn_forward.2} parent=31 // loop_footer
                %s199 = sadd.s32 1, %s195
              $region38: #{lightgcn_forward.2} parent=31 // loop_footer_branch
                %194 = sbr.rel target = $region34
              $region39: #{lightgcn_forward.2} parent=31 // loop_exit
                _
            $region32: #{lightgcn_forward.2} parent=23 // pred_fallthru
              _
          $region24: #{lightgcn_forward.2} parent=19 // pred_fallthru
            _
          %278 = vnop
        $region20: #{lightgcn_forward.2} parent=15 // pred_fallthru
          _
        // Predicated region
        $region55: #{lightgcn_forward.2} parent=15 // pred_check
          %p279 = pneg %p71
        $region56: #{lightgcn_forward.2} parent=15 // pred_check_branch
          %281 = sbr.rel (%p279) target = $region58
        $region57: #{lightgcn_forward.2} parent=15 // pred_region
          %s282 = smul.u32 16, %s19
          %p283 = scmp.lt.s32.totalorder %s282, 31
          %s284 = scalar_select %p283, %s282, 31
          %s285 = smul.addr %s284, 8
          %s286 = scalar_lea.vmem %s1, %s285
          %s287 = smul.u32 16, %s19
        $region58: #{lightgcn_forward.2} parent=15 // pred_fallthru
          _
        // Predicated region
        $region59: #{lightgcn_forward.2} parent=15 // pred_check
          %p288 = pneg %p97
        $region60: #{lightgcn_forward.2} parent=15 // pred_check_branch
          %290 = sbr.rel (%p288) target = $region62
        $region61: #{lightgcn_forward.2} parent=15 // pred_region
          %s291 = smul.u32 16, %s18
          %p292 = scmp.lt.s32.totalorder %s291, 31
          %s293 = scalar_select %p292, %s291, 31
          %s294 = smul.addr %s293, 8
          %s295 = scalar_lea.vmem %s2, %s294
          %s296 = smul.u32 16, %s18
        $region62: #{lightgcn_forward.2} parent=15 // pred_fallthru
          _
      $region16: #{lightgcn_forward.2} parent=5 // pred_fallthru
        _
      %p297 = scmp.le.s32.totalorder 1, %s11
      %p298 = scmp.lt.s32.totalorder %s11, 5
      %p299 = pnand %p297, %p298
      %p300 = pneg %p299
      // Predicated region
      $region63: #{lightgcn_forward.2} parent=5 // pred_check
        _
      $region64: #{lightgcn_forward.2} parent=5 // pred_check_branch
        %302 = sbr.rel (%p299) target = $region66
      $region65: #{lightgcn_forward.2} parent=5 // pred_region
        %s303 = ssub.s32 %s11, 1
        %s304 = sand.u32 %s38, 1
        %s305 = sand.u32 %s38, 1
        %s306 = smul.addr %s305, 128
        %s307 = scalar_lea.vmem [#allocation3], %s306
        // Predicated region
        $region67: #{lightgcn_forward.2} parent=65 // pred_check
          %p308 = pneg %p51
        $region68: #{lightgcn_forward.2} parent=65 // pred_check_branch
          %310 = sbr.rel (%p308) target = $region70
        $region69: #{lightgcn_forward.2} parent=65 // pred_region
          _
        $region70: #{lightgcn_forward.2} parent=65 // pred_fallthru
          _
        %s311 = sand.u32 %s38, 1
        %s312 = sand.u32 %s38, 1
        %s313 = smul.addr %s312, 128
        %s314 = scalar_lea.vmem [#allocation3], %s313
        %p315 = pneg %p51
        %p316 = pneg %p48
        %s317 = smul.u32 16, %s21
        %p318 = scmp.lt.s32.totalorder %s317, 31
        %s319 = scalar_select %p318, %s317, 31
        %s320 = smul.addr %s319, 8
        %s321 = scalar_lea.vmem %s1, %s320
        %p322 = pneg %p77
        %p323 = pneg %p74
        %s324 = smul.u32 16, %s20
        %p325 = scmp.lt.s32.totalorder %s324, 31
        %s326 = scalar_select %p325, %s324, 31
        %s327 = smul.addr %s326, 8
        %s328 = scalar_lea.vmem %s2, %s327
        %p329 = pneg %p103
        %p330 = pneg %p100
        %p331 = pneg %p129
        %p332 = pneg %p126
        %s333 = smul.u32 16, %s20
        %p334 = scmp.lt.s32.totalorder %s333, 31
        %s335 = scalar_select %p334, %s333, 31
        %s336 = smul.addr %s335, 8
        %s337 = scalar_lea.vmem %s3, %s336
        %p338 = pneg %p155
        %p339 = pneg %p152
        %s340 = smul.u32 16, %s20
        %p341 = scmp.lt.s32.totalorder %s340, 31
        %s342 = scalar_select %p341, %s340, 31
        %s343 = smul.addr %s342, 8
        %s344 = scalar_lea.vmem %s4, %s343
        %s345 = smul.u32 16, %s20
        %s346 = smul.u32 16, %s21
        %p347 = scmp.lt.s32.totalorder %s346, 31
        %s348 = scalar_select %p347, %s346, 31
        %s349 = smul.addr %s348, 8
        %s350 = scalar_lea.vmem %s1, %s349
        %s351 = smul.u32 16, %s21
        %s352 = smul.u32 16, %s20
        %p353 = scmp.lt.s32.totalorder %s352, 31
        %s354 = scalar_select %p353, %s352, 31
        %s355 = smul.addr %s354, 8
        %s356 = scalar_lea.vmem %s2, %s355
        %s357 = smul.u32 16, %s20
        %s358 = smul.u32 16, %s20
        %p359 = scmp.lt.s32.totalorder %s358, 31
        %s360 = scalar_select %p359, %s358, 31
        %s361 = smul.addr %s360, 8
        %s362 = scalar_lea.vmem %s3, %s361
        %s363 = smul.u32 16, %s20
        %s364 = smul.u32 16, %s20
        %p365 = scmp.lt.s32.totalorder %s364, 31
        %s366 = scalar_select %p365, %s364, 31
        %s367 = smul.addr %s366, 8
        %s368 = scalar_lea.vmem %s4, %s367
        %s369 = smul.u32 16, %s20
        %p370 = scmp.eq.s32.totalorder %s21, 0
        // Predicated region
        $region71: #{lightgcn_forward.2} parent=65 // pred_check
          %p371 = pneg %p370
        $region72: #{lightgcn_forward.2} parent=65 // pred_check_branch
          %373 = sbr.rel (%p371) target = $region74
        $region73: #{lightgcn_forward.2} parent=65 // pred_region
          %vm374 = vcmask 261120
          %375 = vst.msk [vmem:[#allocation2] sm:$0xff] %vm374, 0.0
          %376 = vst.msk [vmem:[#allocation2 + $0x8] sm:$0xff] %vm374, 0.0
          %377 = vst.msk [vmem:[#allocation2 + $0x10] sm:$0xff] %vm374, 0.0
          %378 = vst.msk [vmem:[#allocation2 + $0x18] sm:$0xff] %vm374, 0.0
          %379 = vst.msk [vmem:[#allocation2 + $0x20] sm:$0xff] %vm374, 0.0
          %380 = vst.msk [vmem:[#allocation2 + $0x28] sm:$0xff] %vm374, 0.0
          %381 = vst.msk [vmem:[#allocation2 + $0x30] sm:$0xff] %vm374, 0.0
          %382 = vst.msk [vmem:[#allocation2 + $0x38] sm:$0xff] %vm374, 0.0
          %383 = vst.msk [vmem:[#allocation2 + $0x40] sm:$0xff] %vm374, 0.0
          %384 = vst.msk [vmem:[#allocation2 + $0x48] sm:$0xff] %vm374, 0.0
          %385 = vst.msk [vmem:[#allocation2 + $0x50] sm:$0xff] %vm374, 0.0
          %386 = vst.msk [vmem:[#allocation2 + $0x58] sm:$0xff] %vm374, 0.0
          %387 = vst.msk [vmem:[#allocation2 + $0x60] sm:$0xff] %vm374, 0.0
          %388 = vst.msk [vmem:[#allocation2 + $0x68] sm:$0xff] %vm374, 0.0
          %389 = vst.msk [vmem:[#allocation2 + $0x70] sm:$0xff] %vm374, 0.0
          %390 = vst.msk [vmem:[#allocation2 + $0x78] sm:$0xff] %vm374, 0.0
        $region74: #{lightgcn_forward.2} parent=65 // pred_fallthru
          _
        %v391 = vld [vmem:[#allocation2] sm:$0xff]
        %v392 = vld [vmem:[#allocation2 + $0x8] sm:$0xff]
        %v393 = vld [vmem:[#allocation2 + $0x10] sm:$0xff]
        %v394 = vld [vmem:[#allocation2 + $0x18] sm:$0xff]
        %v395 = vld [vmem:[#allocation2 + $0x20] sm:$0xff]
        %v396 = vld [vmem:[#allocation2 + $0x28] sm:$0xff]
        %v397 = vld [vmem:[#allocation2 + $0x30] sm:$0xff]
        %v398 = vld [vmem:[#allocation2 + $0x38] sm:$0xff]
        %v399 = vld [vmem:[#allocation2 + $0x40] sm:$0xff]
        %v400 = vld [vmem:[#allocation2 + $0x48] sm:$0xff]
        %v401 = vld [vmem:[#allocation2 + $0x50] sm:$0xff]
        %v402 = vld [vmem:[#allocation2 + $0x58] sm:$0xff]
        %v403 = vld [vmem:[#allocation2 + $0x60] sm:$0xff]
        %v404 = vld [vmem:[#allocation2 + $0x68] sm:$0xff]
        %v405 = vld [vmem:[#allocation2 + $0x70] sm:$0xff]
        %v406 = vld [vmem:[#allocation2 + $0x78] sm:$0xff]
        %v407 = vld [vmem:[%s307] sm:$0xff]
        %v408 = vld [vmem:[%s307 + $0x8] sm:$0xff]
        %v409 = vld [vmem:[%s307 + $0x10] sm:$0xff]
        %v410 = vld [vmem:[%s307 + $0x18] sm:$0xff]
        %v411 = vld [vmem:[%s307 + $0x20] sm:$0xff]
        %v412 = vld [vmem:[%s307 + $0x28] sm:$0xff]
        %v413 = vld [vmem:[%s307 + $0x30] sm:$0xff]
        %v414 = vld [vmem:[%s307 + $0x38] sm:$0xff]
        %v415 = vld [vmem:[%s307 + $0x40] sm:$0xff]
        %v416 = vld [vmem:[%s307 + $0x48] sm:$0xff]
        %v417 = vld [vmem:[%s307 + $0x50] sm:$0xff]
        %v418 = vld [vmem:[%s307 + $0x58] sm:$0xff]
        %v419 = vld [vmem:[%s307 + $0x60] sm:$0xff]
        %v420 = vld [vmem:[%s307 + $0x68] sm:$0xff]
        %v421 = vld [vmem:[%s307 + $0x70] sm:$0xff]
        %v422 = vld [vmem:[%s307 + $0x78] sm:$0xff]
        %v423 = vld [vmem:[%s350] sm:$0xff]
        %v424 = vld [vmem:[%s350 + $0x8] sm:$0xff]
        %v425 = vld [vmem:[%s350 + $0x10] sm:$0xff]
        %v426 = vld [vmem:[%s350 + $0x18] sm:$0xff]
        %v427 = vld [vmem:[%s350 + $0x20] sm:$0xff]
        %v428 = vld [vmem:[%s350 + $0x28] sm:$0xff]
        %v429 = vld [vmem:[%s350 + $0x30] sm:$0xff]
        %v430 = vld [vmem:[%s350 + $0x38] sm:$0xff]
        %v431 = vld [vmem:[%s350 + $0x40] sm:$0xff]
        %v432 = vld [vmem:[%s350 + $0x48] sm:$0xff]
        %v433 = vld [vmem:[%s350 + $0x50] sm:$0xff]
        %v434 = vld [vmem:[%s350 + $0x58] sm:$0xff]
        %v435 = vld [vmem:[%s350 + $0x60] sm:$0xff]
        %v436 = vld [vmem:[%s350 + $0x68] sm:$0xff]
        %v437 = vld [vmem:[%s350 + $0x70] sm:$0xff]
        %v438 = vld [vmem:[%s350 + $0x78] sm:$0xff]
        %439 = vmatpush.msra.mxu0 %v438
        %440 = vmatpush.msra.mxu0 %v437
        %441 = vmatpush.msra.mxu0 %v436
        %442 = vmatpush.msra.mxu0 %v435
        %443 = vmatpush.msra.mxu0 %v434
        %444 = vmatpush.msra.mxu0 %v433
        %445 = vmatpush.msra.mxu0 %v432
        %446 = vmatpush.msra.mxu0 %v431
        %447 = vmatpush.msra.mxu0 %v430
        %448 = vmatpush.msra.mxu0 %v429
        %449 = vmatpush.msra.mxu0 %v428
        %450 = vmatpush.msra.mxu0 %v427
        %451 = vmatpush.msra.mxu0 %v426
        %452 = vmatpush.msra.mxu0 %v425
        %453 = vmatpush.msra.mxu0 %v424
        %454 = vmatpush.msra.mxu0 %v423
        %455 = vmatmul.f32.gmra.mxu0 %v407
        %v456 = vpop.f32.mrf.mxu0
        %v457 = vadd.f32 0.0, %v456
        %458 = vmatmul.f32.gmra.mxu0 %v408
        %v459 = vpop.f32.mrf.mxu0
        %v460 = vadd.f32 0.0, %v459
        %461 = vmatmul.f32.gmra.mxu0 %v409
        %v462 = vpop.f32.mrf.mxu0
        %v463 = vadd.f32 0.0, %v462
        %464 = vmatmul.f32.gmra.mxu0 %v410
        %v465 = vpop.f32.mrf.mxu0
        %v466 = vadd.f32 0.0, %v465
        %467 = vmatmul.f32.gmra.mxu0 %v411
        %v468 = vpop.f32.mrf.mxu0
        %v469 = vadd.f32 0.0, %v468
        %470 = vmatmul.f32.gmra.mxu0 %v412
        %v471 = vpop.f32.mrf.mxu0
        %v472 = vadd.f32 0.0, %v471
        %473 = vmatmul.f32.gmra.mxu0 %v413
        %v474 = vpop.f32.mrf.mxu0
        %v475 = vadd.f32 0.0, %v474
        %476 = vmatmul.f32.gmra.mxu0 %v414
        %v477 = vpop.f32.mrf.mxu0
        %v478 = vadd.f32 0.0, %v477
        %479 = vmatmul.f32.gmra.mxu0 %v415
        %v480 = vpop.f32.mrf.mxu0
        %v481 = vadd.f32 0.0, %v480
        %482 = vmatmul.f32.gmra.mxu0 %v416
        %v483 = vpop.f32.mrf.mxu0
        %v484 = vadd.f32 0.0, %v483
        %485 = vmatmul.f32.gmra.mxu0 %v417
        %v486 = vpop.f32.mrf.mxu0
        %v487 = vadd.f32 0.0, %v486
        %488 = vmatmul.f32.gmra.mxu0 %v418
        %v489 = vpop.f32.mrf.mxu0
        %v490 = vadd.f32 0.0, %v489
        %491 = vmatmul.f32.gmra.mxu0 %v419
        %v492 = vpop.f32.mrf.mxu0
        %v493 = vadd.f32 0.0, %v492
        %494 = vmatmul.f32.gmra.mxu0 %v420
        %v495 = vpop.f32.mrf.mxu0
        %v496 = vadd.f32 0.0, %v495
        %497 = vmatmul.f32.gmra.mxu0 %v421
        %v498 = vpop.f32.mrf.mxu0
        %v499 = vadd.f32 0.0, %v498
        %500 = vmatmul.f32.gmra.mxu0 %v422
        %v501 = vpop.f32.mrf.mxu0
        %v502 = vadd.f32 0.0, %v501
        %503 = vdwg.mxu0
        %v504 = vadd.f32 %v391, %v457
        %v505 = vadd.f32 %v392, %v460
        %v506 = vadd.f32 %v393, %v463
        %v507 = vadd.f32 %v394, %v466
        %v508 = vadd.f32 %v395, %v469
        %v509 = vadd.f32 %v396, %v472
        %v510 = vadd.f32 %v397, %v475
        %v511 = vadd.f32 %v398, %v478
        %v512 = vadd.f32 %v399, %v481
        %v513 = vadd.f32 %v400, %v484
        %v514 = vadd.f32 %v401, %v487
        %v515 = vadd.f32 %v402, %v490
        %v516 = vadd.f32 %v403, %v493
        %v517 = vadd.f32 %v404, %v496
        %v518 = vadd.f32 %v405, %v499
        %v519 = vadd.f32 %v406, %v502
        %vm520 = vcmask 261120
        %521 = vst.msk [vmem:[#allocation2] sm:$0xff] %vm520, %v504
        %522 = vst.msk [vmem:[#allocation2 + $0x8] sm:$0xff] %vm520, %v505
        %523 = vst.msk [vmem:[#allocation2 + $0x10] sm:$0xff] %vm520, %v506
        %524 = vst.msk [vmem:[#allocation2 + $0x18] sm:$0xff] %vm520, %v507
        %525 = vst.msk [vmem:[#allocation2 + $0x20] sm:$0xff] %vm520, %v508
        %526 = vst.msk [vmem:[#allocation2 + $0x28] sm:$0xff] %vm520, %v509
        %527 = vst.msk [vmem:[#allocation2 + $0x30] sm:$0xff] %vm520, %v510
        %528 = vst.msk [vmem:[#allocation2 + $0x38] sm:$0xff] %vm520, %v511
        %529 = vst.msk [vmem:[#allocation2 + $0x40] sm:$0xff] %vm520, %v512
        %530 = vst.msk [vmem:[#allocation2 + $0x48] sm:$0xff] %vm520, %v513
        %531 = vst.msk [vmem:[#allocation2 + $0x50] sm:$0xff] %vm520, %v514
        %532 = vst.msk [vmem:[#allocation2 + $0x58] sm:$0xff] %vm520, %v515
        %533 = vst.msk [vmem:[#allocation2 + $0x60] sm:$0xff] %vm520, %v516
        %534 = vst.msk [vmem:[#allocation2 + $0x68] sm:$0xff] %vm520, %v517
        %535 = vst.msk [vmem:[#allocation2 + $0x70] sm:$0xff] %vm520, %v518
        %536 = vst.msk [vmem:[#allocation2 + $0x78] sm:$0xff] %vm520, %v519
        %p537 = scmp.eq.s32.totalorder %s21, 1
        // Predicated region
        $region75: #{lightgcn_forward.2} parent=65 // pred_check
          %p538 = pneg %p537
        $region76: #{lightgcn_forward.2} parent=65 // pred_check_branch
          %540 = sbr.rel (%p538) target = $region78
        $region77: #{lightgcn_forward.2} parent=65 // pred_region
          %v541 = vld [vmem:[#allocation2] sm:$0xff]
          %v542 = vld [vmem:[#allocation2 + $0x8] sm:$0xff]
          %v543 = vld [vmem:[#allocation2 + $0x10] sm:$0xff]
          %v544 = vld [vmem:[#allocation2 + $0x18] sm:$0xff]
          %v545 = vld [vmem:[#allocation2 + $0x20] sm:$0xff]
          %v546 = vld [vmem:[#allocation2 + $0x28] sm:$0xff]
          %v547 = vld [vmem:[#allocation2 + $0x30] sm:$0xff]
          %v548 = vld [vmem:[#allocation2 + $0x38] sm:$0xff]
          %v549 = vld [vmem:[#allocation2 + $0x40] sm:$0xff]
          %v550 = vld [vmem:[#allocation2 + $0x48] sm:$0xff]
          %v551 = vld [vmem:[#allocation2 + $0x50] sm:$0xff]
          %v552 = vld [vmem:[#allocation2 + $0x58] sm:$0xff]
          %v553 = vld [vmem:[#allocation2 + $0x60] sm:$0xff]
          %v554 = vld [vmem:[#allocation2 + $0x68] sm:$0xff]
          %v555 = vld [vmem:[#allocation2 + $0x70] sm:$0xff]
          %v556 = vld [vmem:[#allocation2 + $0x78] sm:$0xff]
          %557 = vst.msk [vmem:[%s362] sm:$0xff] %vm520, %v541
          %558 = vst.msk [vmem:[%s362 + $0x8] sm:$0xff] %vm520, %v542
          %559 = vst.msk [vmem:[%s362 + $0x10] sm:$0xff] %vm520, %v543
          %560 = vst.msk [vmem:[%s362 + $0x18] sm:$0xff] %vm520, %v544
          %561 = vst.msk [vmem:[%s362 + $0x20] sm:$0xff] %vm520, %v545
          %562 = vst.msk [vmem:[%s362 + $0x28] sm:$0xff] %vm520, %v546
          %563 = vst.msk [vmem:[%s362 + $0x30] sm:$0xff] %vm520, %v547
          %564 = vst.msk [vmem:[%s362 + $0x38] sm:$0xff] %vm520, %v548
          %565 = vst.msk [vmem:[%s362 + $0x40] sm:$0xff] %vm520, %v549
          %566 = vst.msk [vmem:[%s362 + $0x48] sm:$0xff] %vm520, %v550
          %567 = vst.msk [vmem:[%s362 + $0x50] sm:$0xff] %vm520, %v551
          %568 = vst.msk [vmem:[%s362 + $0x58] sm:$0xff] %vm520, %v552
          %569 = vst.msk [vmem:[%s362 + $0x60] sm:$0xff] %vm520, %v553
          %570 = vst.msk [vmem:[%s362 + $0x68] sm:$0xff] %vm520, %v554
          %571 = vst.msk [vmem:[%s362 + $0x70] sm:$0xff] %vm520, %v555
          %572 = vst.msk [vmem:[%s362 + $0x78] sm:$0xff] %vm520, %v556
          %v573 = vld [vmem:[%s356] sm:$0xff]
          %v574 = vld [vmem:[%s356 + $0x8] sm:$0xff]
          %v575 = vld [vmem:[%s356 + $0x10] sm:$0xff]
          %v576 = vld [vmem:[%s356 + $0x18] sm:$0xff]
          %v577 = vld [vmem:[%s356 + $0x20] sm:$0xff]
          %v578 = vld [vmem:[%s356 + $0x28] sm:$0xff]
          %v579 = vld [vmem:[%s356 + $0x30] sm:$0xff]
          %v580 = vld [vmem:[%s356 + $0x38] sm:$0xff]
          %v581 = vld [vmem:[%s356 + $0x40] sm:$0xff]
          %v582 = vld [vmem:[%s356 + $0x48] sm:$0xff]
          %v583 = vld [vmem:[%s356 + $0x50] sm:$0xff]
          %v584 = vld [vmem:[%s356 + $0x58] sm:$0xff]
          %v585 = vld [vmem:[%s356 + $0x60] sm:$0xff]
          %v586 = vld [vmem:[%s356 + $0x68] sm:$0xff]
          %v587 = vld [vmem:[%s356 + $0x70] sm:$0xff]
          %v588 = vld [vmem:[%s356 + $0x78] sm:$0xff]
          %v589 = vadd.f32 %v573, %v541
          %v590 = vadd.f32 %v574, %v542
          %v591 = vadd.f32 %v575, %v543
          %v592 = vadd.f32 %v576, %v544
          %v593 = vadd.f32 %v577, %v545
          %v594 = vadd.f32 %v578, %v546
          %v595 = vadd.f32 %v579, %v547
          %v596 = vadd.f32 %v580, %v548
          %v597 = vadd.f32 %v581, %v549
          %v598 = vadd.f32 %v582, %v550
          %v599 = vadd.f32 %v583, %v551
          %v600 = vadd.f32 %v584, %v552
          %v601 = vadd.f32 %v585, %v553
          %v602 = vadd.f32 %v586, %v554
          %v603 = vadd.f32 %v587, %v555
          %v604 = vadd.f32 %v588, %v556
          %605 = vst.msk [vmem:[%s368] sm:$0xff] %vm520, %v589
          %606 = vst.msk [vmem:[%s368 + $0x8] sm:$0xff] %vm520, %v590
          %607 = vst.msk [vmem:[%s368 + $0x10] sm:$0xff] %vm520, %v591
          %608 = vst.msk [vmem:[%s368 + $0x18] sm:$0xff] %vm520, %v592
          %609 = vst.msk [vmem:[%s368 + $0x20] sm:$0xff] %vm520, %v593
          %610 = vst.msk [vmem:[%s368 + $0x28] sm:$0xff] %vm520, %v594
          %611 = vst.msk [vmem:[%s368 + $0x30] sm:$0xff] %vm520, %v595
          %612 = vst.msk [vmem:[%s368 + $0x38] sm:$0xff] %vm520, %v596
          %613 = vst.msk [vmem:[%s368 + $0x40] sm:$0xff] %vm520, %v597
          %614 = vst.msk [vmem:[%s368 + $0x48] sm:$0xff] %vm520, %v598
          %615 = vst.msk [vmem:[%s368 + $0x50] sm:$0xff] %vm520, %v599
          %616 = vst.msk [vmem:[%s368 + $0x58] sm:$0xff] %vm520, %v600
          %617 = vst.msk [vmem:[%s368 + $0x60] sm:$0xff] %vm520, %v601
          %618 = vst.msk [vmem:[%s368 + $0x68] sm:$0xff] %vm520, %v602
          %619 = vst.msk [vmem:[%s368 + $0x70] sm:$0xff] %vm520, %v603
          %620 = vst.msk [vmem:[%s368 + $0x78] sm:$0xff] %vm520, %v604
        $region78: #{lightgcn_forward.2} parent=65 // pred_fallthru
          _
        %s621 = smul.u32 16, %s20
        %p622 = scmp.lt.s32.totalorder %s621, 31
        %s623 = scalar_select %p622, %s621, 31
        %s624 = smul.addr %s623, 8
        %s625 = scalar_lea.vmem %s3, %s624
        %s626 = smul.u32 16, %s20
        %p627 = scmp.lt.s32.totalorder %s626, 31
        %s628 = scalar_select %p627, %s626, 31
        %s629 = smul.addr %s628, 8
        %s630 = scalar_lea.vmem %s4, %s629
        // Predicated region
        $region79: #{lightgcn_forward.2} parent=65 // pred_check
          %p631 = pneg %p126
        $region80: #{lightgcn_forward.2} parent=65 // pred_check_branch
          %633 = sbr.rel (%p631) target = $region82
        $region81: #{lightgcn_forward.2} parent=65 // pred_region
          %s634 = smul.u32 16, %s20
        $region82: #{lightgcn_forward.2} parent=65 // pred_fallthru
          _
        // Predicated region
        $region83: #{lightgcn_forward.2} parent=65 // pred_check
          %p635 = pneg %p152
        $region84: #{lightgcn_forward.2} parent=65 // pred_check_branch
          %637 = sbr.rel (%p635) target = $region86
        $region85: #{lightgcn_forward.2} parent=65 // pred_region
          %s638 = smul.u32 16, %s20
        $region86: #{lightgcn_forward.2} parent=65 // pred_fallthru
          _
      $region66: #{lightgcn_forward.2} parent=5 // pred_fallthru
        _
      %p639 = scmp.le.s32.totalorder 2, %s11
      // Predicated region
      $region87: #{lightgcn_forward.2} parent=5 // pred_check
        %p640 = pneg %p639
      $region88: #{lightgcn_forward.2} parent=5 // pred_check_branch
        %642 = sbr.rel (%p640) target = $region90
      $region89: #{lightgcn_forward.2} parent=5 // pred_region
        %s643 = ssub.s32 %s11, 2
        // Predicated region
        $region91: #{lightgcn_forward.2} parent=89 // pred_check
          %p644 = pneg %p132
        $region92: #{lightgcn_forward.2} parent=89 // pred_check_branch
          %646 = sbr.rel (%p644) target = $region94
        $region93: #{lightgcn_forward.2} parent=89 // pred_region
          %s647 = smul.u32 16, %s22
          %p648 = scmp.lt.s32.totalorder %s647, 31
          %s649 = scalar_select %p648, %s647, 31
          %s650 = smul.addr %s649, 8
          %s651 = scalar_lea.vmem %s3, %s650
        $region94: #{lightgcn_forward.2} parent=89 // pred_fallthru
          _
        // Predicated region
        $region95: #{lightgcn_forward.2} parent=89 // pred_check
          %p652 = pneg %p158
        $region96: #{lightgcn_forward.2} parent=89 // pred_check_branch
          %654 = sbr.rel (%p652) target = $region98
        $region97: #{lightgcn_forward.2} parent=89 // pred_region
          %s655 = smul.u32 16, %s22
          %p656 = scmp.lt.s32.totalorder %s655, 31
          %s657 = scalar_select %p656, %s655, 31
          %s658 = smul.addr %s657, 8
          %s659 = scalar_lea.vmem %s4, %s658
        $region98: #{lightgcn_forward.2} parent=89 // pred_fallthru
          _
      $region90: #{lightgcn_forward.2} parent=5 // pred_fallthru
        _
    $region6: #{lightgcn_forward.2} parent=1 // loop_footer
      %s15 = sadd.s32 1, %s11
    $region7: #{lightgcn_forward.2} parent=1 // loop_footer_branch
      %10 = sbr.rel target = $region3
    $region8: #{lightgcn_forward.2} parent=1 // loop_exit
      _

// kernel: lightgcn_forward.3
$region0: #{lightgcn_forward.3}
  #allocation0 [shape = 'u32[]', space=smem, size = 0x4, offset = 0x4, fixed_abs, tag = 'smem constant byte address 0x4 - core index']
  #allocation1 [shape = 'u32[72,128]{1,0:T(1,128)}', space=vmem, size = 0x9000, scoped, tag = 'internal scratch']
  #allocation2 [shape = 'f32[128,32]{1,0:T(8,128)}', space=vmem, size = 0x10000, scoped, tag = 'scratch operand']
  %s0 = inlined_call_operand.vmem [shape: f32[256,256], index: 0, kind: input, shape index: {}]
  %s1 = inlined_call_operand.vmem [shape: f32[256,32], index: 1, kind: input, shape index: {}]
  %s2 = inlined_call_operand.vmem [shape: f32[256,32], index: 2, kind: input, shape index: {}]
  %s3 = inlined_call_operand.hbm [shape: f32[256,32], index: 3, kind: output, shape index: {0}]
  %s4 = inlined_call_operand.vmem [shape: f32[256,32], index: 4, kind: output, shape index: {1}]
  %5 = xla_tuple %s3, %s4
  %s6 = sld [smem:[#allocation0]]
  $region99: #{lightgcn_forward.3} parent=0
    _
  %s8 = ssub.s32 1, %s6
  %s9 = scalar_select 0, %s8, %s6
  $region1: #{lightgcn_forward.3} parent=0
    #allocation3 [shape = 'u8[131072]{0}', space=vmem, size = 0x20000, scoped, tag = 'input window, operand 0']
    #allocation4 [shape = 'u8[131072]{0}', space=vmem, size = 0x20000, scoped, tag = 'output window, operand 0']
    #allocation5 [shape = 's32[2]{0}', space=sflag, size = 0x8, scoped, tag = 'scoped memory for lightgcn_forward.3']
    %10 = vsyncpa [#allocation5], 0
    %s11 = scalar_lea.sflag [#allocation5], 1
    %12 = vsyncpa %s11, 0
    loop: start=0, step=1, limit=6
    $region2: #{lightgcn_forward.3} parent=1 // loop_pre_header
      _
    $region3: #{lightgcn_forward.3} parent=1 // loop_header
      %s14 = sphi 0, %s18
      %p15 = scmp.ge.s32.totalorder %s14, 6
      %s21 = sphi 0, %s33
      %s22 = sphi 0, %s29
      %s23 = sphi 0, %s21
      %s24 = sphi 0, %s22
      %s25 = sphi 0, %s23
      %s26 = sphi 0, %s24
      %s38 = sphi 0, %s40
      %s41 = sphi 0, %s38
      %s42 = sphi 0, %s41
      %s58 = sphi 0, %s42
      %s64 = sphi 0, %s66
      %s67 = sphi 0, %s64
      %s68 = sphi 0, %s67
      %s84 = sphi 0, %s68
      %s90 = sphi 0, %s92
      %s93 = sphi 0, %s90
      %s94 = sphi 0, %s93
      %s110 = sphi 0, %s94
      %s116 = sphi 0, %s118
      %s119 = sphi 0, %s116
      %s120 = sphi 0, %s119
      %s136 = sphi 0, %s120
      %s142 = sphi 0, %s144
      %s145 = sphi 0, %s142
      %s146 = sphi 0, %s145
      %s162 = sphi 0, %s146
    $region4: #{lightgcn_forward.3} parent=1 // loop_header_branch
      %17 = sbr.rel (%p15) target = $region8
    $region5: #{lightgcn_forward.3} parent=1 // loop_body
      %s19 = ssub.s32 %s14, 1
      %s20 = ssub.s32 %s14, 2
      %s27 = sadd.s32 1, %s22
      %p28 = scmp.ge.s32.totalorder %s27, 2
      %s29 = scalar_select %p28, 0, %s27
      %s30 = sadd.s32 1, %s21
      %s31 = scalar_select %p28, %s30, %s21
      %p32 = scmp.ge.s32.totalorder %s31, 2
      %s33 = scalar_select %p32, 0, %s31
      %s34 = ssub.s32 %s21, %s33
      %s35 = ssub.s32 %s22, %s29
      %s36 = sor.u32 %s34, %s35
      %p37 = scmp.eq.s32.totalorder %s36, 0
      %s39 = sadd.s32 %s38, 1
      %s40 = scalar_select %p37, %s38, %s39
      %p43 = pneg %p37
      %p44 = scmp.eq.s32.totalorder %s14, 3
      %p45 = por %p43, %p44
      %p46 = scmp.ne.s32.totalorder %s38, %s41
      %p47 = scmp.eq.s32.totalorder %s14, 0
      %p48 = por %p46, %p47
      %p49 = scmp.ne.s32.totalorder %s38, %s41
      %p50 = scmp.eq.s32.totalorder %s19, 3
      %p51 = por %p49, %p50
      %p52 = scmp.ne.s32.totalorder %s41, %s42
      %p53 = scmp.eq.s32.totalorder %s19, 0
      %p54 = por %p52, %p53
      %p55 = scmp.ne.s32.totalorder %s41, %s42
      %p56 = scmp.eq.s32.totalorder %s20, 3
      %p57 = por %p55, %p56
      %p59 = scmp.ne.s32.totalorder %s42, %s58
      %p60 = scmp.eq.s32.totalorder %s20, 0
      %p61 = por %p59, %p60
      %s62 = ssub.s32 %s22, %s29
      %p63 = scmp.eq.s32.totalorder %s62, 0
      %s65 = sadd.s32 %s64, 1
      %s66 = scalar_select %p63, %s64, %s65
      %p69 = pneg %p63
      %p70 = scmp.eq.s32.totalorder %s14, 3
      %p71 = por %p69, %p70
      %p72 = scmp.ne.s32.totalorder %s64, %s67
      %p73 = scmp.eq.s32.totalorder %s14, 0
      %p74 = por %p72, %p73
      %p75 = scmp.ne.s32.totalorder %s64, %s67
      %p76 = scmp.eq.s32.totalorder %s19, 3
      %p77 = por %p75, %p76
      %p78 = scmp.ne.s32.totalorder %s67, %s68
      %p79 = scmp.eq.s32.totalorder %s19, 0
      %p80 = por %p78, %p79
      %p81 = scmp.ne.s32.totalorder %s67, %s68
      %p82 = scmp.eq.s32.totalorder %s20, 3
      %p83 = por %p81, %p82
      %p85 = scmp.ne.s32.totalorder %s68, %s84
      %p86 = scmp.eq.s32.totalorder %s20, 0
      %p87 = por %p85, %p86
      %s88 = ssub.s32 %s21, %s33
      %p89 = scmp.eq.s32.totalorder %s88, 0
      %s91 = sadd.s32 %s90, 1
      %s92 = scalar_select %p89, %s90, %s91
      %p95 = pneg %p89
      %p96 = scmp.eq.s32.totalorder %s14, 3
      %p97 = por %p95, %p96
      %p98 = scmp.ne.s32.totalorder %s90, %s93
      %p99 = scmp.eq.s32.totalorder %s14, 0
      %p100 = por %p98, %p99
      %p101 = scmp.ne.s32.totalorder %s90, %s93
      %p102 = scmp.eq.s32.totalorder %s19, 3
      %p103 = por %p101, %p102
      %p104 = scmp.ne.s32.totalorder %s93, %s94
      %p105 = scmp.eq.s32.totalorder %s19, 0
      %p106 = por %p104, %p105
      %p107 = scmp.ne.s32.totalorder %s93, %s94
      %p108 = scmp.eq.s32.totalorder %s20, 3
      %p109 = por %p107, %p108
      %p111 = scmp.ne.s32.totalorder %s94, %s110
      %p112 = scmp.eq.s32.totalorder %s20, 0
      %p113 = por %p111, %p112
      %s114 = ssub.s32 %s21, %s33
      %p115 = scmp.eq.s32.totalorder %s114, 0
      %s117 = sadd.s32 %s116, 1
      %s118 = scalar_select %p115, %s116, %s117
      %p121 = pneg %p115
      %p122 = scmp.eq.s32.totalorder %s14, 3
      %p123 = por %p121, %p122
      %p124 = scmp.ne.s32.totalorder %s116, %s119
      %p125 = scmp.eq.s32.totalorder %s14, 0
      %p126 = por %p124, %p125
      %p127 = scmp.ne.s32.totalorder %s116, %s119
      %p128 = scmp.eq.s32.totalorder %s19, 3
      %p129 = por %p127, %p128
      %p130 = scmp.ne.s32.totalorder %s119, %s120
      %p131 = scmp.eq.s32.totalorder %s19, 0
      %p132 = por %p130, %p131
      %p133 = scmp.ne.s32.totalorder %s119, %s120
      %p134 = scmp.eq.s32.totalorder %s20, 3
      %p135 = por %p133, %p134
      %p137 = scmp.ne.s32.totalorder %s120, %s136
      %p138 = scmp.eq.s32.totalorder %s20, 0
      %p139 = por %p137, %p138
      %s140 = ssub.s32 %s21, %s33
      %p141 = scmp.eq.s32.totalorder %s140, 0
      %s143 = sadd.s32 %s142, 1
      %s144 = scalar_select %p141, %s142, %s143
      %p147 = pneg %p141
      %p148 = scmp.eq.s32.totalorder %s14, 3
      %p149 = por %p147, %p148
      %p150 = scmp.ne.s32.totalorder %s142, %s145
      %p151 = scmp.eq.s32.totalorder %s14, 0
      %p152 = por %p150, %p151
      %p153 = scmp.ne.s32.totalorder %s142, %s145
      %p154 = scmp.eq.s32.totalorder %s19, 3
      %p155 = por %p153, %p154
      %p156 = scmp.ne.s32.totalorder %s145, %s146
      %p157 = scmp.eq.s32.totalorder %s19, 0
      %p158 = por %p156, %p157
      %p159 = scmp.ne.s32.totalorder %s145, %s146
      %p160 = scmp.eq.s32.totalorder %s20, 3
      %p161 = por %p159, %p160
      %p163 = scmp.ne.s32.totalorder %s146, %s162
      %p164 = scmp.eq.s32.totalorder %s20, 0
      %p165 = por %p163, %p164
      %p166 = scmp.le.s32.totalorder 1, %s14
      %p167 = scmp.lt.s32.totalorder %s14, 5
      %p168 = pnand %p166, %p167
      %p169 = pneg %p168
      // Predicated region
      $region9: #{lightgcn_forward.3} parent=5 // pred_check
        _
      $region10: #{lightgcn_forward.3} parent=5 // pred_check_branch
        %171 = sbr.rel (%p168) target = $region12
      $region11: #{lightgcn_forward.3} parent=5 // pred_region
        %s172 = ssub.s32 %s14, 1
      $region12: #{lightgcn_forward.3} parent=5 // pred_fallthru
        _
      %p173 = scmp.lt.s32.totalorder %s14, 4
      // Predicated region
      $region13: #{lightgcn_forward.3} parent=5 // pred_check
        %p174 = pneg %p173
      $region14: #{lightgcn_forward.3} parent=5 // pred_check_branch
        %176 = sbr.rel (%p174) target = $region16
      $region15: #{lightgcn_forward.3} parent=5 // pred_region
        // Predicated region
        $region17: #{lightgcn_forward.3} parent=15 // pred_check
          %p177 = pneg %p48
        $region18: #{lightgcn_forward.3} parent=15 // pred_check_branch
          %179 = sbr.rel (%p177) target = $region20
        $region19: #{lightgcn_forward.3} parent=15 // pred_region
          %s180 = sand.u32 %s38, 1
          %s181 = sand.u32 %s38, 1
          %s182 = smul.addr %s181, 128
          %s183 = scalar_lea.vmem [#allocation3], %s182
          %s184 = smul.u32 16, %s21
          %s185 = smul.addr %s184, 2
          %s186 = sadd.s32 %s22, %s185
          %s187 = smul.addr %s186, 8
          %s188 = scalar_lea.vmem %s0, %s187
          // Predicated region
          $region21: #{lightgcn_forward.3} parent=19 // pred_check
            _
          $region22: #{lightgcn_forward.3} parent=19 // pred_check_branch
            %190 = sbr.rel (0) target = $region24
          $region23: #{lightgcn_forward.3} parent=19 // pred_region
            // Predicated region
            $region25: #{lightgcn_forward.3} parent=23 // pred_check
              _
            $region26: #{lightgcn_forward.3} parent=23 // pred_check_branch
              %192 = sbr.rel (0) target = $region28
            $region27: #{lightgcn_forward.3} parent=23 // pred_region
              // Predicated region
              $region40: #{lightgcn_forward.3} parent=27 // pred_check
                _
              $region41: #{lightgcn_forward.3} parent=27 // pred_check_branch
                %238 = sbr.rel (0) target = $region43
              $region42: #{lightgcn_forward.3} parent=27 // pred_region
                loop: start=0, step=1, limit=1
                $region44: #{lightgcn_forward.3} parent=42 // loop_pre_header
                  _
                $region45: #{lightgcn_forward.3} parent=42 // loop_header
                  %s240 = sphi 0, %s244
                  %p241 = scmp.ge.s32.totalorder %s240, 1
                  %s245 = sphi %s188, %s188
                  %s246 = sphi %s183, %s183
                $region46: #{lightgcn_forward.3} parent=42 // loop_header_branch
                  %243 = sbr.rel (%p241) target = $region50
                $region47: #{lightgcn_forward.3} parent=42 // loop_body
                  %v247 = vld [vmem:[%s245] sm:$0xff]
                  %248 = vst [vmem:[%s246] sm:$0xff] %v247
                  %v249 = vld [vmem:[%s245 + $0x10] sm:$0xff]
                  %250 = vst [vmem:[%s246 + $0x8] sm:$0xff] %v249
                  %v251 = vld [vmem:[%s245 + $0x20] sm:$0xff]
                  %252 = vst [vmem:[%s246 + $0x10] sm:$0xff] %v251
                  %v253 = vld [vmem:[%s245 + $0x30] sm:$0xff]
                  %254 = vst [vmem:[%s246 + $0x18] sm:$0xff] %v253
                  %v255 = vld [vmem:[%s245 + $0x40] sm:$0xff]
                  %256 = vst [vmem:[%s246 + $0x20] sm:$0xff] %v255
                  %v257 = vld [vmem:[%s245 + $0x50] sm:$0xff]
                  %258 = vst [vmem:[%s246 + $0x28] sm:$0xff] %v257
                  %v259 = vld [vmem:[%s245 + $0x60] sm:$0xff]
                  %260 = vst [vmem:[%s246 + $0x30] sm:$0xff] %v259
                  %v261 = vld [vmem:[%s245 + $0x70] sm:$0xff]
                  %262 = vst [vmem:[%s246 + $0x38] sm:$0xff] %v261
                  %v263 = vld [vmem:[%s245 + $0x80] sm:$0xff]
                  %264 = vst [vmem:[%s246 + $0x40] sm:$0xff] %v263
                  %v265 = vld [vmem:[%s245 + $0x90] sm:$0xff]
                  %266 = vst [vmem:[%s246 + $0x48] sm:$0xff] %v265
                  %v267 = vld [vmem:[%s245 + $0xa0] sm:$0xff]
                  %268 = vst [vmem:[%s246 + $0x50] sm:$0xff] %v267
                  %v269 = vld [vmem:[%s245 + $0xb0] sm:$0xff]
                  %270 = vst [vmem:[%s246 + $0x58] sm:$0xff] %v269
                  %v271 = vld [vmem:[%s245 + $0xc0] sm:$0xff]
                  %272 = vst [vmem:[%s246 + $0x60] sm:$0xff] %v271
                  %v273 = vld [vmem:[%s245 + $0xd0] sm:$0xff]
                  %274 = vst [vmem:[%s246 + $0x68] sm:$0xff] %v273
                  %v275 = vld [vmem:[%s245 + $0xe0] sm:$0xff]
                  %276 = vst [vmem:[%s246 + $0x70] sm:$0xff] %v275
                  %v277 = vld [vmem:[%s245 + $0xf0] sm:$0xff]
                  %278 = vst [vmem:[%s246 + $0x78] sm:$0xff] %v277
                $region48: #{lightgcn_forward.3} parent=42 // loop_footer
                  %s244 = sadd.s32 1, %s240
                $region49: #{lightgcn_forward.3} parent=42 // loop_footer_branch
                  %239 = sbr.rel target = $region45
                $region50: #{lightgcn_forward.3} parent=42 // loop_exit
                  _
              $region43: #{lightgcn_forward.3} parent=27 // pred_fallthru
                _
              // Predicated region
              $region51: #{lightgcn_forward.3} parent=27 // pred_check
                _
              $region52: #{lightgcn_forward.3} parent=27 // pred_check_branch
                %280 = sbr.rel target = $region54
              $region53: #{lightgcn_forward.3} parent=27 // pred_region
                _
              $region54: #{lightgcn_forward.3} parent=27 // pred_fallthru
                _
            $region28: #{lightgcn_forward.3} parent=23 // pred_fallthru
              _
            // Predicated region
            $region29: #{lightgcn_forward.3} parent=23 // pred_check
              _
            $region30: #{lightgcn_forward.3} parent=23 // pred_check_branch
              %194 = sbr.rel target = $region32
            $region31: #{lightgcn_forward.3} parent=23 // pred_region
              %s196 = ssub.s32 256, 1
              loop: start=0, step=1, limit=1
              $region33: #{lightgcn_forward.3} parent=31 // loop_pre_header
                _
              $region34: #{lightgcn_forward.3} parent=31 // loop_header
                %s198 = sphi 0, %s202
                %p199 = scmp.ge.s32.totalorder %s198, 1
                %s203 = sphi %s188, %s188
                %s204 = sphi %s183, %s183
              $region35: #{lightgcn_forward.3} parent=31 // loop_header_branch
                %201 = sbr.rel (%p199) target = $region39
              $region36: #{lightgcn_forward.3} parent=31 // loop_body
                %v205 = vld [vmem:[%s203] sm:%s196]
                %206 = vst [vmem:[%s204] sm:%s196] %v205
                %v207 = vld [vmem:[%s203 + $0x10] sm:%s196]
                %208 = vst [vmem:[%s204 + $0x8] sm:%s196] %v207
                %v209 = vld [vmem:[%s203 + $0x20] sm:%s196]
                %210 = vst [vmem:[%s204 + $0x10] sm:%s196] %v209
                %v211 = vld [vmem:[%s203 + $0x30] sm:%s196]
                %212 = vst [vmem:[%s204 + $0x18] sm:%s196] %v211
                %v213 = vld [vmem:[%s203 + $0x40] sm:%s196]
                %214 = vst [vmem:[%s204 + $0x20] sm:%s196] %v213
                %v215 = vld [vmem:[%s203 + $0x50] sm:%s196]
                %216 = vst [vmem:[%s204 + $0x28] sm:%s196] %v215
                %v217 = vld [vmem:[%s203 + $0x60] sm:%s196]
                %218 = vst [vmem:[%s204 + $0x30] sm:%s196] %v217
                %v219 = vld [vmem:[%s203 + $0x70] sm:%s196]
                %220 = vst [vmem:[%s204 + $0x38] sm:%s196] %v219
                %v221 = vld [vmem:[%s203 + $0x80] sm:%s196]
                %222 = vst [vmem:[%s204 + $0x40] sm:%s196] %v221
                %v223 = vld [vmem:[%s203 + $0x90] sm:%s196]
                %224 = vst [vmem:[%s204 + $0x48] sm:%s196] %v223
                %v225 = vld [vmem:[%s203 + $0xa0] sm:%s196]
                %226 = vst [vmem:[%s204 + $0x50] sm:%s196] %v225
                %v227 = vld [vmem:[%s203 + $0xb0] sm:%s196]
                %228 = vst [vmem:[%s204 + $0x58] sm:%s196] %v227
                %v229 = vld [vmem:[%s203 + $0xc0] sm:%s196]
                %230 = vst [vmem:[%s204 + $0x60] sm:%s196] %v229
                %v231 = vld [vmem:[%s203 + $0xd0] sm:%s196]
                %232 = vst [vmem:[%s204 + $0x68] sm:%s196] %v231
                %v233 = vld [vmem:[%s203 + $0xe0] sm:%s196]
                %234 = vst [vmem:[%s204 + $0x70] sm:%s196] %v233
                %v235 = vld [vmem:[%s203 + $0xf0] sm:%s196]
                %236 = vst [vmem:[%s204 + $0x78] sm:%s196] %v235
              $region37: #{lightgcn_forward.3} parent=31 // loop_footer
                %s202 = sadd.s32 1, %s198
              $region38: #{lightgcn_forward.3} parent=31 // loop_footer_branch
                %197 = sbr.rel target = $region34
              $region39: #{lightgcn_forward.3} parent=31 // loop_exit
                _
            $region32: #{lightgcn_forward.3} parent=23 // pred_fallthru
              _
          $region24: #{lightgcn_forward.3} parent=19 // pred_fallthru
            _
          %281 = vnop
        $region20: #{lightgcn_forward.3} parent=15 // pred_fallthru
          _
        // Predicated region
        $region55: #{lightgcn_forward.3} parent=15 // pred_check
          %p282 = pneg %p74
        $region56: #{lightgcn_forward.3} parent=15 // pred_check_branch
          %284 = sbr.rel (%p282) target = $region58
        $region57: #{lightgcn_forward.3} parent=15 // pred_region
          %s285 = smul.u32 16, %s22
          %p286 = scmp.lt.s32.totalorder %s285, 31
          %s287 = scalar_select %p286, %s285, 31
          %s288 = smul.addr %s287, 8
          %s289 = scalar_lea.vmem %s1, %s288
          %s290 = smul.u32 16, %s22
        $region58: #{lightgcn_forward.3} parent=15 // pred_fallthru
          _
        // Predicated region
        $region59: #{lightgcn_forward.3} parent=15 // pred_check
          %p291 = pneg %p100
        $region60: #{lightgcn_forward.3} parent=15 // pred_check_branch
          %293 = sbr.rel (%p291) target = $region62
        $region61: #{lightgcn_forward.3} parent=15 // pred_region
          %s294 = smul.u32 16, %s21
          %p295 = scmp.lt.s32.totalorder %s294, 31
          %s296 = scalar_select %p295, %s294, 31
          %s297 = smul.addr %s296, 8
          %s298 = scalar_lea.vmem %s2, %s297
          %s299 = smul.u32 16, %s21
        $region62: #{lightgcn_forward.3} parent=15 // pred_fallthru
          _
      $region16: #{lightgcn_forward.3} parent=5 // pred_fallthru
        _
      %p300 = scmp.le.s32.totalorder 1, %s14
      %p301 = scmp.lt.s32.totalorder %s14, 5
      %p302 = pnand %p300, %p301
      %p303 = pneg %p302
      // Predicated region
      $region63: #{lightgcn_forward.3} parent=5 // pred_check
        _
      $region64: #{lightgcn_forward.3} parent=5 // pred_check_branch
        %305 = sbr.rel (%p302) target = $region66
      $region65: #{lightgcn_forward.3} parent=5 // pred_region
        %s306 = ssub.s32 %s14, 1
        %s307 = sand.u32 %s41, 1
        %s308 = sand.u32 %s41, 1
        %s309 = smul.addr %s308, 128
        %s310 = scalar_lea.vmem [#allocation3], %s309
        // Predicated region
        $region67: #{lightgcn_forward.3} parent=65 // pred_check
          %p311 = pneg %p54
        $region68: #{lightgcn_forward.3} parent=65 // pred_check_branch
          %313 = sbr.rel (%p311) target = $region70
        $region69: #{lightgcn_forward.3} parent=65 // pred_region
          _
        $region70: #{lightgcn_forward.3} parent=65 // pred_fallthru
          _
        %s314 = sand.u32 %s41, 1
        %s315 = sand.u32 %s41, 1
        %s316 = smul.addr %s315, 128
        %s317 = scalar_lea.vmem [#allocation3], %s316
        %p318 = pneg %p54
        %p319 = pneg %p51
        %s320 = smul.u32 16, %s24
        %p321 = scmp.lt.s32.totalorder %s320, 31
        %s322 = scalar_select %p321, %s320, 31
        %s323 = smul.addr %s322, 8
        %s324 = scalar_lea.vmem %s1, %s323
        %p325 = pneg %p80
        %p326 = pneg %p77
        %s327 = smul.u32 16, %s23
        %p328 = scmp.lt.s32.totalorder %s327, 31
        %s329 = scalar_select %p328, %s327, 31
        %s330 = smul.addr %s329, 8
        %s331 = scalar_lea.vmem %s2, %s330
        %p332 = pneg %p106
        %p333 = pneg %p103
        %p334 = pneg %p132
        %p335 = pneg %p129
        %s336 = sand.u32 %s119, 1
        %s337 = scalar_lea.sflag [#allocation5], %s336
        %s338 = sand.u32 %s119, 1
        %s339 = smul.addr %s338, 128
        %s340 = scalar_lea.vmem [#allocation4], %s339
        %p341 = pneg %p158
        %p342 = pneg %p155
        %s343 = smul.u32 16, %s23
        %p344 = scmp.lt.s32.totalorder %s343, 31
        %s345 = scalar_select %p344, %s343, 31
        %s346 = smul.addr %s345, 8
        %s347 = scalar_lea.vmem %s4, %s346
        %s348 = smul.u32 16, %s23
        %s349 = smul.u32 16, %s24
        %p350 = scmp.lt.s32.totalorder %s349, 31
        %s351 = scalar_select %p350, %s349, 31
        %s352 = smul.addr %s351, 8
        %s353 = scalar_lea.vmem %s1, %s352
        %s354 = smul.u32 16, %s24
        %s355 = smul.u32 16, %s23
        %p356 = scmp.lt.s32.totalorder %s355, 31
        %s357 = scalar_select %p356, %s355, 31
        %s358 = smul.addr %s357, 8
        %s359 = scalar_lea.vmem %s2, %s358
        %s360 = smul.u32 16, %s23
        %s361 = smul.u32 16, %s23
        %s362 = smul.u32 16, %s23
        %p363 = scmp.lt.s32.totalorder %s362, 31
        %s364 = scalar_select %p363, %s362, 31
        %s365 = smul.addr %s364, 8
        %s366 = scalar_lea.vmem %s4, %s365
        %s367 = smul.u32 16, %s23
        %p368 = scmp.eq.s32.totalorder %s24, 0
        // Predicated region
        $region71: #{lightgcn_forward.3} parent=65 // pred_check
          %p369 = pneg %p368
        $region72: #{lightgcn_forward.3} parent=65 // pred_check_branch
          %371 = sbr.rel (%p369) target = $region74
        $region73: #{lightgcn_forward.3} parent=65 // pred_region
          %vm372 = vcmask 261120
          %373 = vst.msk [vmem:[#allocation2] sm:$0xff] %vm372, 0.0
          %374 = vst.msk [vmem:[#allocation2 + $0x8] sm:$0xff] %vm372, 0.0
          %375 = vst.msk [vmem:[#allocation2 + $0x10] sm:$0xff] %vm372, 0.0
          %376 = vst.msk [vmem:[#allocation2 + $0x18] sm:$0xff] %vm372, 0.0
          %377 = vst.msk [vmem:[#allocation2 + $0x20] sm:$0xff] %vm372, 0.0
          %378 = vst.msk [vmem:[#allocation2 + $0x28] sm:$0xff] %vm372, 0.0
          %379 = vst.msk [vmem:[#allocation2 + $0x30] sm:$0xff] %vm372, 0.0
          %380 = vst.msk [vmem:[#allocation2 + $0x38] sm:$0xff] %vm372, 0.0
          %381 = vst.msk [vmem:[#allocation2 + $0x40] sm:$0xff] %vm372, 0.0
          %382 = vst.msk [vmem:[#allocation2 + $0x48] sm:$0xff] %vm372, 0.0
          %383 = vst.msk [vmem:[#allocation2 + $0x50] sm:$0xff] %vm372, 0.0
          %384 = vst.msk [vmem:[#allocation2 + $0x58] sm:$0xff] %vm372, 0.0
          %385 = vst.msk [vmem:[#allocation2 + $0x60] sm:$0xff] %vm372, 0.0
          %386 = vst.msk [vmem:[#allocation2 + $0x68] sm:$0xff] %vm372, 0.0
          %387 = vst.msk [vmem:[#allocation2 + $0x70] sm:$0xff] %vm372, 0.0
          %388 = vst.msk [vmem:[#allocation2 + $0x78] sm:$0xff] %vm372, 0.0
        $region74: #{lightgcn_forward.3} parent=65 // pred_fallthru
          _
        %v389 = vld [vmem:[#allocation2] sm:$0xff]
        %v390 = vld [vmem:[#allocation2 + $0x8] sm:$0xff]
        %v391 = vld [vmem:[#allocation2 + $0x10] sm:$0xff]
        %v392 = vld [vmem:[#allocation2 + $0x18] sm:$0xff]
        %v393 = vld [vmem:[#allocation2 + $0x20] sm:$0xff]
        %v394 = vld [vmem:[#allocation2 + $0x28] sm:$0xff]
        %v395 = vld [vmem:[#allocation2 + $0x30] sm:$0xff]
        %v396 = vld [vmem:[#allocation2 + $0x38] sm:$0xff]
        %v397 = vld [vmem:[#allocation2 + $0x40] sm:$0xff]
        %v398 = vld [vmem:[#allocation2 + $0x48] sm:$0xff]
        %v399 = vld [vmem:[#allocation2 + $0x50] sm:$0xff]
        %v400 = vld [vmem:[#allocation2 + $0x58] sm:$0xff]
        %v401 = vld [vmem:[#allocation2 + $0x60] sm:$0xff]
        %v402 = vld [vmem:[#allocation2 + $0x68] sm:$0xff]
        %v403 = vld [vmem:[#allocation2 + $0x70] sm:$0xff]
        %v404 = vld [vmem:[#allocation2 + $0x78] sm:$0xff]
        %v405 = vld [vmem:[%s310] sm:$0xff]
        %v406 = vld [vmem:[%s310 + $0x8] sm:$0xff]
        %v407 = vld [vmem:[%s310 + $0x10] sm:$0xff]
        %v408 = vld [vmem:[%s310 + $0x18] sm:$0xff]
        %v409 = vld [vmem:[%s310 + $0x20] sm:$0xff]
        %v410 = vld [vmem:[%s310 + $0x28] sm:$0xff]
        %v411 = vld [vmem:[%s310 + $0x30] sm:$0xff]
        %v412 = vld [vmem:[%s310 + $0x38] sm:$0xff]
        %v413 = vld [vmem:[%s310 + $0x40] sm:$0xff]
        %v414 = vld [vmem:[%s310 + $0x48] sm:$0xff]
        %v415 = vld [vmem:[%s310 + $0x50] sm:$0xff]
        %v416 = vld [vmem:[%s310 + $0x58] sm:$0xff]
        %v417 = vld [vmem:[%s310 + $0x60] sm:$0xff]
        %v418 = vld [vmem:[%s310 + $0x68] sm:$0xff]
        %v419 = vld [vmem:[%s310 + $0x70] sm:$0xff]
        %v420 = vld [vmem:[%s310 + $0x78] sm:$0xff]
        %v421 = vld [vmem:[%s353] sm:$0xff]
        %v422 = vld [vmem:[%s353 + $0x8] sm:$0xff]
        %v423 = vld [vmem:[%s353 + $0x10] sm:$0xff]
        %v424 = vld [vmem:[%s353 + $0x18] sm:$0xff]
        %v425 = vld [vmem:[%s353 + $0x20] sm:$0xff]
        %v426 = vld [vmem:[%s353 + $0x28] sm:$0xff]
        %v427 = vld [vmem:[%s353 + $0x30] sm:$0xff]
        %v428 = vld [vmem:[%s353 + $0x38] sm:$0xff]
        %v429 = vld [vmem:[%s353 + $0x40] sm:$0xff]
        %v430 = vld [vmem:[%s353 + $0x48] sm:$0xff]
        %v431 = vld [vmem:[%s353 + $0x50] sm:$0xff]
        %v432 = vld [vmem:[%s353 + $0x58] sm:$0xff]
        %v433 = vld [vmem:[%s353 + $0x60] sm:$0xff]
        %v434 = vld [vmem:[%s353 + $0x68] sm:$0xff]
        %v435 = vld [vmem:[%s353 + $0x70] sm:$0xff]
        %v436 = vld [vmem:[%s353 + $0x78] sm:$0xff]
        %437 = vmatpush.msra.mxu0 %v436
        %438 = vmatpush.msra.mxu0 %v435
        %439 = vmatpush.msra.mxu0 %v434
        %440 = vmatpush.msra.mxu0 %v433
        %441 = vmatpush.msra.mxu0 %v432
        %442 = vmatpush.msra.mxu0 %v431
        %443 = vmatpush.msra.mxu0 %v430
        %444 = vmatpush.msra.mxu0 %v429
        %445 = vmatpush.msra.mxu0 %v428
        %446 = vmatpush.msra.mxu0 %v427
        %447 = vmatpush.msra.mxu0 %v426
        %448 = vmatpush.msra.mxu0 %v425
        %449 = vmatpush.msra.mxu0 %v424
        %450 = vmatpush.msra.mxu0 %v423
        %451 = vmatpush.msra.mxu0 %v422
        %452 = vmatpush.msra.mxu0 %v421
        %453 = vmatmul.f32.gmra.mxu0 %v405
        %v454 = vpop.f32.mrf.mxu0
        %v455 = vadd.f32 0.0, %v454
        %456 = vmatmul.f32.gmra.mxu0 %v406
        %v457 = vpop.f32.mrf.mxu0
        %v458 = vadd.f32 0.0, %v457
        %459 = vmatmul.f32.gmra.mxu0 %v407
        %v460 = vpop.f32.mrf.mxu0
        %v461 = vadd.f32 0.0, %v460
        %462 = vmatmul.f32.gmra.mxu0 %v408
        %v463 = vpop.f32.mrf.mxu0
        %v464 = vadd.f32 0.0, %v463
        %465 = vmatmul.f32.gmra.mxu0 %v409
        %v466 = vpop.f32.mrf.mxu0
        %v467 = vadd.f32 0.0, %v466
        %468 = vmatmul.f32.gmra.mxu0 %v410
        %v469 = vpop.f32.mrf.mxu0
        %v470 = vadd.f32 0.0, %v469
        %471 = vmatmul.f32.gmra.mxu0 %v411
        %v472 = vpop.f32.mrf.mxu0
        %v473 = vadd.f32 0.0, %v472
        %474 = vmatmul.f32.gmra.mxu0 %v412
        %v475 = vpop.f32.mrf.mxu0
        %v476 = vadd.f32 0.0, %v475
        %477 = vmatmul.f32.gmra.mxu0 %v413
        %v478 = vpop.f32.mrf.mxu0
        %v479 = vadd.f32 0.0, %v478
        %480 = vmatmul.f32.gmra.mxu0 %v414
        %v481 = vpop.f32.mrf.mxu0
        %v482 = vadd.f32 0.0, %v481
        %483 = vmatmul.f32.gmra.mxu0 %v415
        %v484 = vpop.f32.mrf.mxu0
        %v485 = vadd.f32 0.0, %v484
        %486 = vmatmul.f32.gmra.mxu0 %v416
        %v487 = vpop.f32.mrf.mxu0
        %v488 = vadd.f32 0.0, %v487
        %489 = vmatmul.f32.gmra.mxu0 %v417
        %v490 = vpop.f32.mrf.mxu0
        %v491 = vadd.f32 0.0, %v490
        %492 = vmatmul.f32.gmra.mxu0 %v418
        %v493 = vpop.f32.mrf.mxu0
        %v494 = vadd.f32 0.0, %v493
        %495 = vmatmul.f32.gmra.mxu0 %v419
        %v496 = vpop.f32.mrf.mxu0
        %v497 = vadd.f32 0.0, %v496
        %498 = vmatmul.f32.gmra.mxu0 %v420
        %v499 = vpop.f32.mrf.mxu0
        %v500 = vadd.f32 0.0, %v499
        %501 = vdwg.mxu0
        %v502 = vadd.f32 %v389, %v455
        %v503 = vadd.f32 %v390, %v458
        %v504 = vadd.f32 %v391, %v461
        %v505 = vadd.f32 %v392, %v464
        %v506 = vadd.f32 %v393, %v467
        %v507 = vadd.f32 %v394, %v470
        %v508 = vadd.f32 %v395, %v473
        %v509 = vadd.f32 %v396, %v476
        %v510 = vadd.f32 %v397, %v479
        %v511 = vadd.f32 %v398, %v482
        %v512 = vadd.f32 %v399, %v485
        %v513 = vadd.f32 %v400, %v488
        %v514 = vadd.f32 %v401, %v491
        %v515 = vadd.f32 %v402, %v494
        %v516 = vadd.f32 %v403, %v497
        %v517 = vadd.f32 %v404, %v500
        %vm518 = vcmask 261120
        %519 = vst.msk [vmem:[#allocation2] sm:$0xff] %vm518, %v502
        %520 = vst.msk [vmem:[#allocation2 + $0x8] sm:$0xff] %vm518, %v503
        %521 = vst.msk [vmem:[#allocation2 + $0x10] sm:$0xff] %vm518, %v504
        %522 = vst.msk [vmem:[#allocation2 + $0x18] sm:$0xff] %vm518, %v505
        %523 = vst.msk [vmem:[#allocation2 + $0x20] sm:$0xff] %vm518, %v506
        %524 = vst.msk [vmem:[#allocation2 + $0x28] sm:$0xff] %vm518, %v507
        %525 = vst.msk [vmem:[#allocation2 + $0x30] sm:$0xff] %vm518, %v508
        %526 = vst.msk [vmem:[#allocation2 + $0x38] sm:$0xff] %vm518, %v509
        %527 = vst.msk [vmem:[#allocation2 + $0x40] sm:$0xff] %vm518, %v510
        %528 = vst.msk [vmem:[#allocation2 + $0x48] sm:$0xff] %vm518, %v511
        %529 = vst.msk [vmem:[#allocation2 + $0x50] sm:$0xff] %vm518, %v512
        %530 = vst.msk [vmem:[#allocation2 + $0x58] sm:$0xff] %vm518, %v513
        %531 = vst.msk [vmem:[#allocation2 + $0x60] sm:$0xff] %vm518, %v514
        %532 = vst.msk [vmem:[#allocation2 + $0x68] sm:$0xff] %vm518, %v515
        %533 = vst.msk [vmem:[#allocation2 + $0x70] sm:$0xff] %vm518, %v516
        %534 = vst.msk [vmem:[#allocation2 + $0x78] sm:$0xff] %vm518, %v517
        %p535 = scmp.eq.s32.totalorder %s24, 1
        // Predicated region
        $region75: #{lightgcn_forward.3} parent=65 // pred_check
          %p536 = pneg %p535
        $region76: #{lightgcn_forward.3} parent=65 // pred_check_branch
          %538 = sbr.rel (%p536) target = $region78
        $region77: #{lightgcn_forward.3} parent=65 // pred_region
          %v539 = vld [vmem:[#allocation2] sm:$0xff]
          %v540 = vld [vmem:[#allocation2 + $0x8] sm:$0xff]
          %v541 = vld [vmem:[#allocation2 + $0x10] sm:$0xff]
          %v542 = vld [vmem:[#allocation2 + $0x18] sm:$0xff]
          %v543 = vld [vmem:[#allocation2 + $0x20] sm:$0xff]
          %v544 = vld [vmem:[#allocation2 + $0x28] sm:$0xff]
          %v545 = vld [vmem:[#allocation2 + $0x30] sm:$0xff]
          %v546 = vld [vmem:[#allocation2 + $0x38] sm:$0xff]
          %v547 = vld [vmem:[#allocation2 + $0x40] sm:$0xff]
          %v548 = vld [vmem:[#allocation2 + $0x48] sm:$0xff]
          %v549 = vld [vmem:[#allocation2 + $0x50] sm:$0xff]
          %v550 = vld [vmem:[#allocation2 + $0x58] sm:$0xff]
          %v551 = vld [vmem:[#allocation2 + $0x60] sm:$0xff]
          %v552 = vld [vmem:[#allocation2 + $0x68] sm:$0xff]
          %v553 = vld [vmem:[#allocation2 + $0x70] sm:$0xff]
          %v554 = vld [vmem:[#allocation2 + $0x78] sm:$0xff]
          %555 = vst.msk [vmem:[%s340] sm:$0xff] %vm518, %v539
          %556 = vst.msk [vmem:[%s340 + $0x8] sm:$0xff] %vm518, %v540
          %557 = vst.msk [vmem:[%s340 + $0x10] sm:$0xff] %vm518, %v541
          %558 = vst.msk [vmem:[%s340 + $0x18] sm:$0xff] %vm518, %v542
          %559 = vst.msk [vmem:[%s340 + $0x20] sm:$0xff] %vm518, %v543
          %560 = vst.msk [vmem:[%s340 + $0x28] sm:$0xff] %vm518, %v544
          %561 = vst.msk [vmem:[%s340 + $0x30] sm:$0xff] %vm518, %v545
          %562 = vst.msk [vmem:[%s340 + $0x38] sm:$0xff] %vm518, %v546
          %563 = vst.msk [vmem:[%s340 + $0x40] sm:$0xff] %vm518, %v547
          %564 = vst.msk [vmem:[%s340 + $0x48] sm:$0xff] %vm518, %v548
          %565 = vst.msk [vmem:[%s340 + $0x50] sm:$0xff] %vm518, %v549
          %566 = vst.msk [vmem:[%s340 + $0x58] sm:$0xff] %vm518, %v550
          %567 = vst.msk [vmem:[%s340 + $0x60] sm:$0xff] %vm518, %v551
          %568 = vst.msk [vmem:[%s340 + $0x68] sm:$0xff] %vm518, %v552
          %569 = vst.msk [vmem:[%s340 + $0x70] sm:$0xff] %vm518, %v553
          %570 = vst.msk [vmem:[%s340 + $0x78] sm:$0xff] %vm518, %v554
          %v571 = vld [vmem:[%s359] sm:$0xff]
          %v572 = vld [vmem:[%s359 + $0x8] sm:$0xff]
          %v573 = vld [vmem:[%s359 + $0x10] sm:$0xff]
          %v574 = vld [vmem:[%s359 + $0x18] sm:$0xff]
          %v575 = vld [vmem:[%s359 + $0x20] sm:$0xff]
          %v576 = vld [vmem:[%s359 + $0x28] sm:$0xff]
          %v577 = vld [vmem:[%s359 + $0x30] sm:$0xff]
          %v578 = vld [vmem:[%s359 + $0x38] sm:$0xff]
          %v579 = vld [vmem:[%s359 + $0x40] sm:$0xff]
          %v580 = vld [vmem:[%s359 + $0x48] sm:$0xff]
          %v581 = vld [vmem:[%s359 + $0x50] sm:$0xff]
          %v582 = vld [vmem:[%s359 + $0x58] sm:$0xff]
          %v583 = vld [vmem:[%s359 + $0x60] sm:$0xff]
          %v584 = vld [vmem:[%s359 + $0x68] sm:$0xff]
          %v585 = vld [vmem:[%s359 + $0x70] sm:$0xff]
          %v586 = vld [vmem:[%s359 + $0x78] sm:$0xff]
          %v587 = vadd.f32 %v571, %v539
          %v588 = vadd.f32 %v572, %v540
          %v589 = vadd.f32 %v573, %v541
          %v590 = vadd.f32 %v574, %v542
          %v591 = vadd.f32 %v575, %v543
          %v592 = vadd.f32 %v576, %v544
          %v593 = vadd.f32 %v577, %v545
          %v594 = vadd.f32 %v578, %v546
          %v595 = vadd.f32 %v579, %v547
          %v596 = vadd.f32 %v580, %v548
          %v597 = vadd.f32 %v581, %v549
          %v598 = vadd.f32 %v582, %v550
          %v599 = vadd.f32 %v583, %v551
          %v600 = vadd.f32 %v584, %v552
          %v601 = vadd.f32 %v585, %v553
          %v602 = vadd.f32 %v586, %v554
          %603 = vst.msk [vmem:[%s366] sm:$0xff] %vm518, %v587
          %604 = vst.msk [vmem:[%s366 + $0x8] sm:$0xff] %vm518, %v588
          %605 = vst.msk [vmem:[%s366 + $0x10] sm:$0xff] %vm518, %v589
          %606 = vst.msk [vmem:[%s366 + $0x18] sm:$0xff] %vm518, %v590
          %607 = vst.msk [vmem:[%s366 + $0x20] sm:$0xff] %vm518, %v591
          %608 = vst.msk [vmem:[%s366 + $0x28] sm:$0xff] %vm518, %v592
          %609 = vst.msk [vmem:[%s366 + $0x30] sm:$0xff] %vm518, %v593
          %610 = vst.msk [vmem:[%s366 + $0x38] sm:$0xff] %vm518, %v594
          %611 = vst.msk [vmem:[%s366 + $0x40] sm:$0xff] %vm518, %v595
          %612 = vst.msk [vmem:[%s366 + $0x48] sm:$0xff] %vm518, %v596
          %613 = vst.msk [vmem:[%s366 + $0x50] sm:$0xff] %vm518, %v597
          %614 = vst.msk [vmem:[%s366 + $0x58] sm:$0xff] %vm518, %v598
          %615 = vst.msk [vmem:[%s366 + $0x60] sm:$0xff] %vm518, %v599
          %616 = vst.msk [vmem:[%s366 + $0x68] sm:$0xff] %vm518, %v600
          %617 = vst.msk [vmem:[%s366 + $0x70] sm:$0xff] %vm518, %v601
          %618 = vst.msk [vmem:[%s366 + $0x78] sm:$0xff] %vm518, %v602
        $region78: #{lightgcn_forward.3} parent=65 // pred_fallthru
          _
        %s619 = sand.u32 %s119, 1
        %s620 = scalar_lea.sflag [#allocation5], %s619
        %s621 = sand.u32 %s119, 1
        %s622 = smul.addr %s621, 128
        %s623 = scalar_lea.vmem [#allocation4], %s622
        %s624 = smul.u32 16, %s23
        %p625 = scmp.lt.s32.totalorder %s624, 31
        %s626 = scalar_select %p625, %s624, 31
        %s627 = smul.addr %s626, 8
        %s628 = scalar_lea.vmem %s4, %s627
        // Predicated region
        $region79: #{lightgcn_forward.3} parent=65 // pred_check
          %p629 = pneg %p129
        $region80: #{lightgcn_forward.3} parent=65 // pred_check_branch
          %631 = sbr.rel (%p629) target = $region82
        $region81: #{lightgcn_forward.3} parent=65 // pred_region
          %s632 = smul.u32 16, %s23
          %634 = vsyncadd %s620, 0
          %s635 = smul.addr %s632, 8
          %s636 = scalar_lea.hbm %s3, %s635
          %s637 = sshll.u32 %s623, 4
          %s638 = int_to_ptr.vmem [resolvable:$true] %s637
          %s639 = sshll.u32 %s636, 4
          %s640 = int_to_ptr.hbm [resolvable:$true] %s639
          %645 = dma.vmem_to_hbm [thread:$0]  %s638, 2048, %s640, %s620, 128, 128, 8
        $region82: #{lightgcn_forward.3} parent=65 // pred_fallthru
          _
        // Predicated region
        $region83: #{lightgcn_forward.3} parent=65 // pred_check
          %p646 = pneg %p155
        $region84: #{lightgcn_forward.3} parent=65 // pred_check_branch
          %648 = sbr.rel (%p646) target = $region86
        $region85: #{lightgcn_forward.3} parent=65 // pred_region
          %s649 = smul.u32 16, %s23
        $region86: #{lightgcn_forward.3} parent=65 // pred_fallthru
          _
      $region66: #{lightgcn_forward.3} parent=5 // pred_fallthru
        _
      %p650 = scmp.le.s32.totalorder 2, %s14
      // Predicated region
      $region87: #{lightgcn_forward.3} parent=5 // pred_check
        %p651 = pneg %p650
      $region88: #{lightgcn_forward.3} parent=5 // pred_check_branch
        %653 = sbr.rel (%p651) target = $region90
      $region89: #{lightgcn_forward.3} parent=5 // pred_region
        %s654 = ssub.s32 %s14, 2
        // Predicated region
        $region91: #{lightgcn_forward.3} parent=89 // pred_check
          %p655 = pneg %p135
        $region92: #{lightgcn_forward.3} parent=89 // pred_check_branch
          %657 = sbr.rel (%p655) target = $region94
        $region93: #{lightgcn_forward.3} parent=89 // pred_region
          %s658 = sand.u32 %s120, 1
          %s659 = scalar_lea.sflag [#allocation5], %s658
          %s660 = sand.u32 %s120, 1
          %s661 = smul.addr %s660, 128
          %s662 = scalar_lea.vmem [#allocation4], %s661
          %664 = dma.done %s659, 2048
        $region94: #{lightgcn_forward.3} parent=89 // pred_fallthru
          _
        // Predicated region
        $region95: #{lightgcn_forward.3} parent=89 // pred_check
          %p665 = pneg %p161
        $region96: #{lightgcn_forward.3} parent=89 // pred_check_branch
          %667 = sbr.rel (%p665) target = $region98
        $region97: #{lightgcn_forward.3} parent=89 // pred_region
          %s668 = smul.u32 16, %s25
          %p669 = scmp.lt.s32.totalorder %s668, 31
          %s670 = scalar_select %p669, %s668, 31
          %s671 = smul.addr %s670, 8
          %s672 = scalar_lea.vmem %s4, %s671
        $region98: #{lightgcn_forward.3} parent=89 // pred_fallthru
          _
      $region90: #{lightgcn_forward.3} parent=5 // pred_fallthru
        _
    $region6: #{lightgcn_forward.3} parent=1 // loop_footer
      %s18 = sadd.s32 1, %s14
    $region7: #{lightgcn_forward.3} parent=1 // loop_footer_branch
      %13 = sbr.rel target = $region3
    $region8: #{lightgcn_forward.3} parent=1 // loop_exit
      _
    %673 = vsyncpa [#allocation5], 1
    %s674 = scalar_lea.sflag [#allocation5], 1
    %675 = vsyncpa %s674, 1

</llo_original>
